<compile_context>
chip_gen: v5e
topology: v5e:2x2
jax: 0.10.0
libtpu: 0.0.40
codegen_flags: <defaults>
</compile_context>

<pallas_src>
import functools

import jax
import jax.numpy as jnp
from jax import lax
from jax.experimental import pallas as pl
from jax.experimental.pallas import tpu as pltpu

_INV_SQRT2 = 0.7071067811865476


def _erf_nonneg_f32(x):
    # Abramowitz & Stegun 7.1.26 rational approximation of erf for x >= 0
    # (max abs error ~1.5e-7).  y >= 0 always (abs upstream), so no sign logic.
    a1 = 0.254829592
    a2 = -0.284496736
    a3 = 1.421413741
    a4 = -1.453152027
    a5 = 1.061405429
    p = 0.3275911
    d = 1.0 + p * x
    # Feedback #1: move the divide off the saturated VALU onto the nearly-idle
    # EUP (vrcp).  One Newton-Raphson refinement (~3 VALU ops) keeps the
    # per-element error at ~1e-8 so the 1e-4 check is guaranteed; remove the
    # refinement line if pure-approx (~1e-4/elem) is re-validated on hardware.
    t = pl.reciprocal(d, approx=True)
    t = t * (2.0 - d * t)
    poly = ((((a5 * t + a4) * t + a3) * t + a2) * t + a1) * t
    return 1.0 - poly * jnp.exp(-x * x)


def _erf_loss_kernel(label_ref, mu_ref, std_ref, w_ref, out_ref, *, c_chunk):
    """Writes per-(b,d) partial: 2*erf(y[b,label_b,d]) - sum_c erf(y[b,c,d])."""
    i = pl.program_id(0)
    tb, D = mu_ref.shape
    C = w_ref.shape[0]

    mu = mu_ref[...].astype(jnp.float32)          # (tb, D)
    std = std_ref[...].astype(jnp.float32)        # (tb, D)
    # Hoisted scale: one divide per (tb, D) element, off the critical path.
    inv_scale = jnp.float32(_INV_SQRT2) / (std + 1e-8)

    # ---- label-row gather folded into the kernel (feedback #6) -------------
    # Labels arrive via scalar prefetch (SMEM).  Gather the tb label rows from
    # the VMEM-resident weight with a 0/1 one-hot matmul on the otherwise-idle
    # MXU (exact for one-hot operands) — no wrapper jnp.take, no w_lab stream.
    class_iota = lax.broadcasted_iota(jnp.int32, (1, C), 1)          # (1, C)
    oh_rows = [(class_iota == label_ref[i * tb + r]).astype(jnp.float32)
               for r in range(tb)]
    one_hot = jnp.concatenate(oh_rows, axis=0)                        # (tb, C)
    # TODO(synk): for very large C*D, fold this dot into the chunk loop below
    # and add a C grid axis (marked "arbitrary") with pl.when init/finalize
    # accumulation instead of loading the whole (C, D) weight as one operand.
    w_lab = jnp.dot(one_hot, w_ref[...].astype(jnp.float32),
                    preferred_element_type=jnp.float32)               # (tb, D)
    two_lab = 2.0 * _erf_nonneg_f32(jnp.abs(w_lab - mu) * inv_scale)  # (tb, D)

    # ---- main class sum, chunked to bound the vreg working set -------------
    # Broadcast views hoisted out of the loop (broadcast_in_dim is not CSE'd).
    mu_b = mu[:, None, :]                 # (tb, 1, D)
    inv_b = inv_scale[:, None, :]         # (tb, 1, D)
    n_chunks = C // c_chunk

    def body(ci, erf_acc):
        c0 = pl.multiple_of(ci * c_chunk, c_chunk)
        w_chunk = w_ref[pl.ds(c0, c_chunk), :].astype(jnp.float32)    # (cc, D)
        y = jnp.abs(w_chunk[None, :, :] - mu_b) * inv_b               # (tb, cc, D)
        return erf_acc + jnp.sum(_erf_nonneg_f32(y), axis=1)          # (tb, D)

    # Feedback #5: bounded unroll (not unroll=True) so the ~4-5 live
    # (tb, c_chunk, D) temps (<= ~8 vregs each) fit the 64-vreg file without
    # spilling, and compile time stays sane for large C.
    erf_sum = lax.fori_loop(0, n_chunks, body,
                            jnp.zeros((tb, D), jnp.float32), unroll=2)

    # Lane-dense (tb, D) partial; the tiny final reduction happens in plain JAX.
    # TODO(synk): for D >> 128, accumulate down to a (tb, 128) partial here to
    # cut output writeback by D/128 (feedback #7; a no-op at D == 128).
    out_ref[...] = two_lab - erf_sum


def _device_params():
    """Generation-aware VMEM budget, scoped-VMEM limit and min grid steps."""
    kind = ""
    try:
        kind = jax.devices()[0].device_kind.lower()
    except Exception:
        pass
    if "v7" in kind:
        # 64 MiB physical VMEM, 2 TensorCores -> keep >= 2 grid steps so the
        # "parallel" batch axis can be split across both cores.
        # (pltpu.CORE_PARALLEL is an option if explicit per-core splitting is
        #  ever needed; plain "parallel" is kept here for portability.)
        return {"vmem_budget": 24 << 20, "vmem_limit": 48 << 20, "min_grid_steps": 2}
    if "v6" in kind:
        # 128 MiB physical VMEM, 1 TensorCore.
        return {"vmem_budget": 48 << 20, "vmem_limit": 96 << 20, "min_grid_steps": 1}
    if "v5e" in kind or "v5 lite" in kind or "v5lite" in kind:
        # 128 MiB physical, but 16 MiB default scoped limit -> raise it.
        return {"vmem_budget": 32 << 20, "vmem_limit": 64 << 20, "min_grid_steps": 1}
    # Unknown generation: conservative budget, assume possibly-multi-core.
    return {"vmem_budget": 16 << 20, "vmem_limit": None, "min_grid_steps": 2}


def _pick_tiles(B, C, D, *, vmem_budget, min_grid_steps):
    """Pick (tb, c_chunk) under a per-temp vreg cap and a VMEM budget."""
    c_chunk = 8 if C % 8 == 0 else C          # sublane-aligned class chunks
    temp_cap = 8192                           # ~8 vregs per (tb, c_chunk, D) f32 temp
    cands = [t for t in range(B, 0, -1) if B % t == 0 and (t % 8 == 0 or t == B)]
    if not cands:
        cands = [t for t in range(B, 0, -1) if B % t == 0]
    pref = [t for t in cands if B // t >= min_grid_steps] or cands
    for tb in pref:
        # 2x double-buffered (mu, std, out) tiles + ONE resident weight copy
        # + headroom for ~4 live (tb, c_chunk, D) f32 temps.
        need = 4 * (2 * 3 * tb * D + C * D + 4 * tb * c_chunk * D)
        if tb * c_chunk * D <= temp_cap and need <= vmem_budget:
            return tb, c_chunk
    return pref[-1], c_chunk


def erf_loss_pallas(mu, std, label, weight, *, tb=None, c_chunk=None):
    B, D = mu.shape
    C, D2 = weight.shape
    assert D == D2

    dev = _device_params()
    auto_tb, auto_cc = _pick_tiles(B, C, D, vmem_budget=dev["vmem_budget"],
                                   min_grid_steps=dev["min_grid_steps"])
    tb = auto_tb if tb is None else tb
    c_chunk = auto_cc if c_chunk is None else c_chunk
    assert B % tb == 0 and C % c_chunk == 0

    cp_kwargs = dict(dimension_semantics=("parallel",))
    if dev["vmem_limit"] is not None:
        cp_kwargs["vmem_limit_bytes"] = dev["vmem_limit"]
    compiler_params = pltpu.CompilerParams(**cp_kwargs)

    # Feedback #9: advisory cost so XLA schedules neighbouring ops sensibly.
    cost = pl.CostEstimate(
        flops=25 * B * C * D,
        transcendentals=B * C * D + 2 * B * D,
        bytes_accessed=4 * (C * D + 3 * B * D) + 4 * B,
    )

    kernel = functools.partial(_erf_loss_kernel, c_chunk=c_chunk)

    def build(single_copy_weight):
        if single_copy_weight:
            # Feedback #3: weight's block index never changes -> keep exactly
            # ONE whole-array copy resident in VMEM (no double buffer).
            w_spec = pl.BlockSpec(memory_space=pltpu.MemorySpace.VMEM)
        else:
            # Previously validated blocked (double-buffered) spec.
            w_spec = pl.BlockSpec((C, D), lambda i, lab: (0, 0))
        return pl.pallas_call(
            kernel,
            out_shape=jax.ShapeDtypeStruct((B, D), jnp.float32),
            grid_spec=pltpu.PrefetchScalarGridSpec(
                num_scalar_prefetch=1,            # label -> SMEM (feedback #6)
                grid=(B // tb,),
                in_specs=[
                    pl.BlockSpec((tb, D), lambda i, lab: (i, 0)),   # mu tile
                    pl.BlockSpec((tb, D), lambda i, lab: (i, 0)),   # std tile
                    w_spec,                                         # weight
                ],
                out_specs=pl.BlockSpec((tb, D), lambda i, lab: (i, 0)),
            ),
            compiler_params=compiler_params,
            cost_estimate=cost,
        )

    label_i32 = label.astype(jnp.int32)
    try:
        partial = build(True)(label_i32, mu, std, weight)
    except Exception:
        # Some JAX versions reject an un-blocked VMEM operand under a grid;
        # fall back to the blocked weight spec that compiled cleanly before.
        partial = build(False)(label_i32, mu, std, weight)

    # loss = mean(erf(one_hot*y)) + mean(erfc((1-one_hot)*y))
    #      = 1 + (2*sum_label erf(y) - sum_all erf(y)) / (B*C*D)
    return 1.0 + jnp.sum(partial) / jnp.float32(B * C * D)


def erf_loss_ref(mu, std, label, weight):
    # Pure-JAX reference (mirrors the erf-based My_LOSS forward exactly).
    from jax.scipy.special import erf, erfc
    mu_e = mu[:, None, :].astype(jnp.float32)
    std_e = std[:, None, :].astype(jnp.float32)
    w_e = weight[None, :, :]
    dist = jnp.abs(w_e - mu_e)
    y = dist / jnp.sqrt(jnp.float32(2.0)) / (std_e + 1e-8)
    oh = jax.nn.one_hot(label, weight.shape[0], dtype=jnp.float32)[:, :, None]
    pos = oh * y
    neg = (1.0 - oh) * y
    return erf(pos).mean() + erfc(neg).mean()


if __name__ == "__main__":
    B, D, C = 16, 128, 16  # batch, embedding_dim (in_features), num_classes (out_features)

    key = jax.random.PRNGKey(0)
    k1, k2, k3, k4 = jax.random.split(key, 4)
    mu = jax.random.normal(k1, (B, D), jnp.float32)
    std = jax.nn.softplus(jax.random.normal(k2, (B, D), jnp.float32))  # positive stds
    label = jax.random.randint(k3, (B,), 0, C)
    # softmax_head.weight: (num_classes, embedding_dim), deterministic init
    weight = 0.02 * jax.random.normal(k4, (C, D), jnp.float32)

    loss = erf_loss_pallas(mu, std, label, weight)
    jax.block_until_ready(loss)

    ref = erf_loss_ref(mu, std, label, weight)
    assert jnp.allclose(loss, ref, atol=1e-4, rtol=1e-4), (loss, ref)
    print("KERNEL_OK")
</pallas_src>

<mosaic_0001>
module attributes {stable_mosaic.version = 11 : i64} {
  func.func @_erf_loss_kernel(%arg0: i32, %arg1: memref<16xi32, #tpu.memory_space<smem>>, %arg2: memref<8x128xf32, #tpu.memory_space<vmem>>, %arg3: memref<8x128xf32, #tpu.memory_space<vmem>>, %arg4: memref<16x128xf32, #tpu.memory_space<vmem>>, %arg5: memref<8x128xf32, #tpu.memory_space<vmem>>) attributes {dimension_semantics = [#tpu.dimension_semantics<parallel>], iteration_bounds = array<i64: 2>, scalar_prefetch = 1 : i64, scratch_operands = 0 : i64, tpu.core_type = #tpu.core_type<tc>, window_params = [{transform_indices = @transform_0, window_bounds = array<i64: 8, 128>}, {transform_indices = @transform_1, window_bounds = array<i64: 8, 128>}, {pipeline_mode = #tpu.pipeline_mode<synchronous>, transform_indices = @transform_2, window_bounds = array<i64: 16, 128>}, {transform_indices = @transform_3, window_bounds = array<i64: 8, 128>}]} {
    %c0 = arith.constant 0 : index
    %c0_0 = arith.constant 0 : index
    %0 = vector.load %arg2[%c0, %c0_0] : memref<8x128xf32, #tpu.memory_space<vmem>>, vector<8x128xf32>
    %c0_1 = arith.constant 0 : index
    %c0_2 = arith.constant 0 : index
    %1 = vector.load %arg3[%c0_1, %c0_2] : memref<8x128xf32, #tpu.memory_space<vmem>>, vector<8x128xf32>
    %cst = arith.constant 9.99999993E-9 : f32
    %2 = vector.broadcast %cst : f32 to vector<8x128xf32>
    %3 = arith.addf %1, %2 : vector<8x128xf32>
    %cst_3 = arith.constant 0.707106769 : f32
    %4 = vector.broadcast %cst_3 : f32 to vector<8x128xf32>
    %5 = arith.divf %4, %3 : vector<8x128xf32>
    %6 = tpu.iota {dimensions = array<i32: 1>} : vector<1x16xi32>
    %c8_i32 = arith.constant 8 : i32
    %7 = arith.muli %arg0, %c8_i32 : i32
    %c0_i32 = arith.constant 0 : i32
    %8 = arith.addi %7, %c0_i32 : i32
    %9 = arith.index_cast %8 : i32 to index
    %10 = memref.load %arg1[%9] : memref<16xi32, #tpu.memory_space<smem>>
    %11 = vector.broadcast %10 : i32 to vector<1x16xi32>
    %12 = arith.cmpi eq, %6, %11 : vector<1x16xi32>
    %13 = arith.extui %12 : vector<1x16xi1> to vector<1x16xi32>
    %14 = arith.sitofp %13 : vector<1x16xi32> to vector<1x16xf32>
    %c8_i32_4 = arith.constant 8 : i32
    %15 = arith.muli %arg0, %c8_i32_4 : i32
    %c1_i32 = arith.constant 1 : i32
    %16 = arith.addi %15, %c1_i32 : i32
    %17 = arith.index_cast %16 : i32 to index
    %18 = memref.load %arg1[%17] : memref<16xi32, #tpu.memory_space<smem>>
    %19 = vector.broadcast %18 : i32 to vector<1x16xi32>
    %20 = arith.cmpi eq, %6, %19 : vector<1x16xi32>
    %21 = arith.extui %20 : vector<1x16xi1> to vector<1x16xi32>
    %22 = arith.sitofp %21 : vector<1x16xi32> to vector<1x16xf32>
    %c8_i32_5 = arith.constant 8 : i32
    %23 = arith.muli %arg0, %c8_i32_5 : i32
    %c2_i32 = arith.constant 2 : i32
    %24 = arith.addi %23, %c2_i32 : i32
    %25 = arith.index_cast %24 : i32 to index
    %26 = memref.load %arg1[%25] : memref<16xi32, #tpu.memory_space<smem>>
    %27 = vector.broadcast %26 : i32 to vector<1x16xi32>
    %28 = arith.cmpi eq, %6, %27 : vector<1x16xi32>
    %29 = arith.extui %28 : vector<1x16xi1> to vector<1x16xi32>
    %30 = arith.sitofp %29 : vector<1x16xi32> to vector<1x16xf32>
    %c8_i32_6 = arith.constant 8 : i32
    %31 = arith.muli %arg0, %c8_i32_6 : i32
    %c3_i32 = arith.constant 3 : i32
    %32 = arith.addi %31, %c3_i32 : i32
    %33 = arith.index_cast %32 : i32 to index
    %34 = memref.load %arg1[%33] : memref<16xi32, #tpu.memory_space<smem>>
    %35 = vector.broadcast %34 : i32 to vector<1x16xi32>
    %36 = arith.cmpi eq, %6, %35 : vector<1x16xi32>
    %37 = arith.extui %36 : vector<1x16xi1> to vector<1x16xi32>
    %38 = arith.sitofp %37 : vector<1x16xi32> to vector<1x16xf32>
    %c8_i32_7 = arith.constant 8 : i32
    %39 = arith.muli %arg0, %c8_i32_7 : i32
    %c4_i32 = arith.constant 4 : i32
    %40 = arith.addi %39, %c4_i32 : i32
    %41 = arith.index_cast %40 : i32 to index
    %42 = memref.load %arg1[%41] : memref<16xi32, #tpu.memory_space<smem>>
    %43 = vector.broadcast %42 : i32 to vector<1x16xi32>
    %44 = arith.cmpi eq, %6, %43 : vector<1x16xi32>
    %45 = arith.extui %44 : vector<1x16xi1> to vector<1x16xi32>
    %46 = arith.sitofp %45 : vector<1x16xi32> to vector<1x16xf32>
    %c8_i32_8 = arith.constant 8 : i32
    %47 = arith.muli %arg0, %c8_i32_8 : i32
    %c5_i32 = arith.constant 5 : i32
    %48 = arith.addi %47, %c5_i32 : i32
    %49 = arith.index_cast %48 : i32 to index
    %50 = memref.load %arg1[%49] : memref<16xi32, #tpu.memory_space<smem>>
    %51 = vector.broadcast %50 : i32 to vector<1x16xi32>
    %52 = arith.cmpi eq, %6, %51 : vector<1x16xi32>
    %53 = arith.extui %52 : vector<1x16xi1> to vector<1x16xi32>
    %54 = arith.sitofp %53 : vector<1x16xi32> to vector<1x16xf32>
    %c8_i32_9 = arith.constant 8 : i32
    %55 = arith.muli %arg0, %c8_i32_9 : i32
    %c6_i32 = arith.constant 6 : i32
    %56 = arith.addi %55, %c6_i32 : i32
    %57 = arith.index_cast %56 : i32 to index
    %58 = memref.load %arg1[%57] : memref<16xi32, #tpu.memory_space<smem>>
    %59 = vector.broadcast %58 : i32 to vector<1x16xi32>
    %60 = arith.cmpi eq, %6, %59 : vector<1x16xi32>
    %61 = arith.extui %60 : vector<1x16xi1> to vector<1x16xi32>
    %62 = arith.sitofp %61 : vector<1x16xi32> to vector<1x16xf32>
    %c8_i32_10 = arith.constant 8 : i32
    %63 = arith.muli %arg0, %c8_i32_10 : i32
    %c7_i32 = arith.constant 7 : i32
    %64 = arith.addi %63, %c7_i32 : i32
    %65 = arith.index_cast %64 : i32 to index
    %66 = memref.load %arg1[%65] : memref<16xi32, #tpu.memory_space<smem>>
    %67 = vector.broadcast %66 : i32 to vector<1x16xi32>
    %68 = arith.cmpi eq, %6, %67 : vector<1x16xi32>
    %69 = arith.extui %68 : vector<1x16xi1> to vector<1x16xi32>
    %70 = arith.sitofp %69 : vector<1x16xi32> to vector<1x16xf32>
    %71 = tpu.concatenate %14, %22, %30, %38, %46, %54, %62, %70 in 0 : vector<1x16xf32>, vector<1x16xf32>, vector<1x16xf32>, vector<1x16xf32>, vector<1x16xf32>, vector<1x16xf32>, vector<1x16xf32>, vector<1x16xf32> -> vector<8x16xf32>
    %c0_11 = arith.constant 0 : index
    %c0_12 = arith.constant 0 : index
    %72 = vector.load %arg4[%c0_11, %c0_12] : memref<16x128xf32, #tpu.memory_space<vmem>>, vector<16x128xf32>
    %cst_13 = arith.constant dense<0.000000e+00> : vector<8x128xf32>
    %73 = tpu.matmul %71, %72, %cst_13 {dimension_numbers = #tpu.dot_dimension_numbers<[1], [0], [0], [1], [0, 0, 1, 1], [], []>} : vector<8x16xf32>, vector<16x128xf32>, vector<8x128xf32> -> vector<8x128xf32>
    %74 = arith.subf %73, %0 : vector<8x128xf32>
    %75 = math.absf %74 : vector<8x128xf32>
    %76 = arith.mulf %75, %5 : vector<8x128xf32>
    %cst_14 = arith.constant 0.327591091 : f32
    %77 = vector.broadcast %cst_14 : f32 to vector<8x128xf32>
    %78 = arith.mulf %77, %76 : vector<8x128xf32>
    %cst_15 = arith.constant 1.000000e+00 : f32
    %79 = vector.broadcast %cst_15 : f32 to vector<8x128xf32>
    %80 = arith.addf %79, %78 : vector<8x128xf32>
    %81 = tpu.reciprocal %80 {approx = true} : vector<8x128xf32> -> vector<8x128xf32>
    %82 = arith.mulf %80, %81 : vector<8x128xf32>
    %cst_16 = arith.constant 2.000000e+00 : f32
    %83 = vector.broadcast %cst_16 : f32 to vector<8x128xf32>
    %84 = arith.subf %83, %82 : vector<8x128xf32>
    %85 = arith.mulf %81, %84 : vector<8x128xf32>
    %cst_17 = arith.constant 1.06140542 : f32
    %86 = vector.broadcast %cst_17 : f32 to vector<8x128xf32>
    %87 = arith.mulf %86, %85 : vector<8x128xf32>
    %cst_18 = arith.constant -1.45315206 : f32
    %88 = vector.broadcast %cst_18 : f32 to vector<8x128xf32>
    %89 = arith.addf %87, %88 : vector<8x128xf32>
    %90 = arith.mulf %89, %85 : vector<8x128xf32>
    %cst_19 = arith.constant 1.42141378 : f32
    %91 = vector.broadcast %cst_19 : f32 to vector<8x128xf32>
    %92 = arith.addf %90, %91 : vector<8x128xf32>
    %93 = arith.mulf %92, %85 : vector<8x128xf32>
    %cst_20 = arith.constant -0.284496725 : f32
    %94 = vector.broadcast %cst_20 : f32 to vector<8x128xf32>
    %95 = arith.addf %93, %94 : vector<8x128xf32>
    %96 = arith.mulf %95, %85 : vector<8x128xf32>
    %cst_21 = arith.constant 0.254829586 : f32
    %97 = vector.broadcast %cst_21 : f32 to vector<8x128xf32>
    %98 = arith.addf %96, %97 : vector<8x128xf32>
    %99 = arith.mulf %98, %85 : vector<8x128xf32>
    %cst_22 = arith.constant 0.000000e+00 : f32
    %100 = vector.broadcast %cst_22 : f32 to vector<8x128xf32>
    %101 = arith.subf %100, %76 : vector<8x128xf32>
    %102 = arith.mulf %101, %76 : vector<8x128xf32>
    %103 = math.exp %102 : vector<8x128xf32>
    %104 = arith.mulf %99, %103 : vector<8x128xf32>
    %cst_23 = arith.constant 1.000000e+00 : f32
    %105 = vector.broadcast %cst_23 : f32 to vector<8x128xf32>
    %106 = arith.subf %105, %104 : vector<8x128xf32>
    %cst_24 = arith.constant 2.000000e+00 : f32
    %107 = vector.broadcast %cst_24 : f32 to vector<8x128xf32>
    %108 = arith.mulf %107, %106 : vector<8x128xf32>
    %109 = vector.shape_cast %0 : vector<8x128xf32> to vector<8x1x128xf32>
    %110 = vector.shape_cast %5 : vector<8x128xf32> to vector<8x1x128xf32>
    %cst_25 = arith.constant 0.000000e+00 : f32
    %111 = vector.broadcast %cst_25 : f32 to vector<8x128xf32>
    %c0_i32_26 = arith.constant 0 : i32
    %c8_i32_27 = arith.constant 8 : i32
    %112 = arith.muli %c0_i32_26, %c8_i32_27 : i32
    %113 = tpu.assume_multiple %112, 8 : i32
    %114 = arith.index_cast %113 : i32 to index
    %c0_28 = arith.constant 0 : index
    %115 = vector.load %arg4[%114, %c0_28] : memref<16x128xf32, #tpu.memory_space<vmem>>, vector<8x128xf32>
    %116 = vector.shape_cast %115 : vector<8x128xf32> to vector<1x8x128xf32>
    %117 = vector.broadcast %116 : vector<1x8x128xf32> to vector<8x8x128xf32>
    %118 = vector.broadcast %109 : vector<8x1x128xf32> to vector<8x8x128xf32>
    %119 = arith.subf %117, %118 : vector<8x8x128xf32>
    %120 = math.absf %119 : vector<8x8x128xf32>
    %121 = vector.broadcast %110 : vector<8x1x128xf32> to vector<8x8x128xf32>
    %122 = arith.mulf %120, %121 : vector<8x8x128xf32>
    %cst_29 = arith.constant 0.327591091 : f32
    %123 = vector.broadcast %cst_29 : f32 to vector<8x8x128xf32>
    %124 = arith.mulf %123, %122 : vector<8x8x128xf32>
    %cst_30 = arith.constant 1.000000e+00 : f32
    %125 = vector.broadcast %cst_30 : f32 to vector<8x8x128xf32>
    %126 = arith.addf %125, %124 : vector<8x8x128xf32>
    %127 = tpu.reciprocal %126 {approx = true} : vector<8x8x128xf32> -> vector<8x8x128xf32>
    %128 = arith.mulf %126, %127 : vector<8x8x128xf32>
    %cst_31 = arith.constant 2.000000e+00 : f32
    %129 = vector.broadcast %cst_31 : f32 to vector<8x8x128xf32>
    %130 = arith.subf %129, %128 : vector<8x8x128xf32>
    %131 = arith.mulf %127, %130 : vector<8x8x128xf32>
    %cst_32 = arith.constant 1.06140542 : f32
    %132 = vector.broadcast %cst_32 : f32 to vector<8x8x128xf32>
    %133 = arith.mulf %132, %131 : vector<8x8x128xf32>
    %cst_33 = arith.constant -1.45315206 : f32
    %134 = vector.broadcast %cst_33 : f32 to vector<8x8x128xf32>
    %135 = arith.addf %133, %134 : vector<8x8x128xf32>
    %136 = arith.mulf %135, %131 : vector<8x8x128xf32>
    %cst_34 = arith.constant 1.42141378 : f32
    %137 = vector.broadcast %cst_34 : f32 to vector<8x8x128xf32>
    %138 = arith.addf %136, %137 : vector<8x8x128xf32>
    %139 = arith.mulf %138, %131 : vector<8x8x128xf32>
    %cst_35 = arith.constant -0.284496725 : f32
    %140 = vector.broadcast %cst_35 : f32 to vector<8x8x128xf32>
    %141 = arith.addf %139, %140 : vector<8x8x128xf32>
    %142 = arith.mulf %141, %131 : vector<8x8x128xf32>
    %cst_36 = arith.constant 0.254829586 : f32
    %143 = vector.broadcast %cst_36 : f32 to vector<8x8x128xf32>
    %144 = arith.addf %142, %143 : vector<8x8x128xf32>
    %145 = arith.mulf %144, %131 : vector<8x8x128xf32>
    %cst_37 = arith.constant 0.000000e+00 : f32
    %146 = vector.broadcast %cst_37 : f32 to vector<8x8x128xf32>
    %147 = arith.subf %146, %122 : vector<8x8x128xf32>
    %148 = arith.mulf %147, %122 : vector<8x8x128xf32>
    %149 = math.exp %148 : vector<8x8x128xf32>
    %150 = arith.mulf %145, %149 : vector<8x8x128xf32>
    %cst_38 = arith.constant 1.000000e+00 : f32
    %151 = vector.broadcast %cst_38 : f32 to vector<8x8x128xf32>
    %152 = arith.subf %151, %150 : vector<8x8x128xf32>
    %cst_39 = arith.constant dense<0.000000e+00> : vector<8x128xf32>
    %153 = vector.multi_reduction <add>, %152, %cst_39 [1] : vector<8x8x128xf32> to vector<8x128xf32>
    %154 = arith.addf %111, %153 : vector<8x128xf32>
    %c1_i32_40 = arith.constant 1 : i32
    %c8_i32_41 = arith.constant 8 : i32
    %155 = arith.muli %c1_i32_40, %c8_i32_41 : i32
    %156 = tpu.assume_multiple %155, 8 : i32
    %157 = arith.index_cast %156 : i32 to index
    %c0_42 = arith.constant 0 : index
    %158 = vector.load %arg4[%157, %c0_42] : memref<16x128xf32, #tpu.memory_space<vmem>>, vector<8x128xf32>
    %159 = vector.shape_cast %158 : vector<8x128xf32> to vector<1x8x128xf32>
    %160 = vector.broadcast %159 : vector<1x8x128xf32> to vector<8x8x128xf32>
    %161 = vector.broadcast %109 : vector<8x1x128xf32> to vector<8x8x128xf32>
    %162 = arith.subf %160, %161 : vector<8x8x128xf32>
    %163 = math.absf %162 : vector<8x8x128xf32>
    %164 = vector.broadcast %110 : vector<8x1x128xf32> to vector<8x8x128xf32>
    %165 = arith.mulf %163, %164 : vector<8x8x128xf32>
    %cst_43 = arith.constant 0.327591091 : f32
    %166 = vector.broadcast %cst_43 : f32 to vector<8x8x128xf32>
    %167 = arith.mulf %166, %165 : vector<8x8x128xf32>
    %cst_44 = arith.constant 1.000000e+00 : f32
    %168 = vector.broadcast %cst_44 : f32 to vector<8x8x128xf32>
    %169 = arith.addf %168, %167 : vector<8x8x128xf32>
    %170 = tpu.reciprocal %169 {approx = true} : vector<8x8x128xf32> -> vector<8x8x128xf32>
    %171 = arith.mulf %169, %170 : vector<8x8x128xf32>
    %cst_45 = arith.constant 2.000000e+00 : f32
    %172 = vector.broadcast %cst_45 : f32 to vector<8x8x128xf32>
    %173 = arith.subf %172, %171 : vector<8x8x128xf32>
    %174 = arith.mulf %170, %173 : vector<8x8x128xf32>
    %cst_46 = arith.constant 1.06140542 : f32
    %175 = vector.broadcast %cst_46 : f32 to vector<8x8x128xf32>
    %176 = arith.mulf %175, %174 : vector<8x8x128xf32>
    %cst_47 = arith.constant -1.45315206 : f32
    %177 = vector.broadcast %cst_47 : f32 to vector<8x8x128xf32>
    %178 = arith.addf %176, %177 : vector<8x8x128xf32>
    %179 = arith.mulf %178, %174 : vector<8x8x128xf32>
    %cst_48 = arith.constant 1.42141378 : f32
    %180 = vector.broadcast %cst_48 : f32 to vector<8x8x128xf32>
    %181 = arith.addf %179, %180 : vector<8x8x128xf32>
    %182 = arith.mulf %181, %174 : vector<8x8x128xf32>
    %cst_49 = arith.constant -0.284496725 : f32
    %183 = vector.broadcast %cst_49 : f32 to vector<8x8x128xf32>
    %184 = arith.addf %182, %183 : vector<8x8x128xf32>
    %185 = arith.mulf %184, %174 : vector<8x8x128xf32>
    %cst_50 = arith.constant 0.254829586 : f32
    %186 = vector.broadcast %cst_50 : f32 to vector<8x8x128xf32>
    %187 = arith.addf %185, %186 : vector<8x8x128xf32>
    %188 = arith.mulf %187, %174 : vector<8x8x128xf32>
    %cst_51 = arith.constant 0.000000e+00 : f32
    %189 = vector.broadcast %cst_51 : f32 to vector<8x8x128xf32>
    %190 = arith.subf %189, %165 : vector<8x8x128xf32>
    %191 = arith.mulf %190, %165 : vector<8x8x128xf32>
    %192 = math.exp %191 : vector<8x8x128xf32>
    %193 = arith.mulf %188, %192 : vector<8x8x128xf32>
    %cst_52 = arith.constant 1.000000e+00 : f32
    %194 = vector.broadcast %cst_52 : f32 to vector<8x8x128xf32>
    %195 = arith.subf %194, %193 : vector<8x8x128xf32>
    %cst_53 = arith.constant dense<0.000000e+00> : vector<8x128xf32>
    %196 = vector.multi_reduction <add>, %195, %cst_53 [1] : vector<8x8x128xf32> to vector<8x128xf32>
    %197 = arith.addf %154, %196 : vector<8x128xf32>
    %c2_i32_54 = arith.constant 2 : i32
    %198 = arith.subf %108, %197 : vector<8x128xf32>
    %c0_55 = arith.constant 0 : index
    %c0_56 = arith.constant 0 : index
    %199 = vector.load %arg5[%c0_55, %c0_56] : memref<8x128xf32, #tpu.memory_space<vmem>>, vector<8x128xf32>
    tpu.vector_store %arg5[%c0_55, %c0_56], %198 {strides = array<i32>} : memref<8x128xf32, #tpu.memory_space<vmem>>, vector<8x128xf32>,
    return
  }
  func.func @transform_0(%arg0: i32, %arg1: memref<16xi32, #tpu.memory_space<smem>>) -> (i32, i32) {
    %c0_i32 = arith.constant 0 : i32
    %c0_i32_0 = arith.constant 0 : i32
    return %arg0, %c0_i32 : i32, i32
  }
  func.func @transform_1(%arg0: i32, %arg1: memref<16xi32, #tpu.memory_space<smem>>) -> (i32, i32) {
    %c0_i32 = arith.constant 0 : i32
    %c0_i32_0 = arith.constant 0 : i32
    return %arg0, %c0_i32 : i32, i32
  }
  func.func @transform_2(%arg0: i32, %arg1: memref<16xi32, #tpu.memory_space<smem>>) -> (i32, i32) {
    %c0_i32 = arith.constant 0 : i32
    %c0_i32_0 = arith.constant 0 : i32
    %c0_i32_1 = arith.constant 0 : i32
    return %c0_i32, %c0_i32_0 : i32, i32
  }
  func.func @transform_3(%arg0: i32, %arg1: memref<16xi32, #tpu.memory_space<smem>>) -> (i32, i32) {
    %c0_i32 = arith.constant 0 : i32
    %c0_i32_0 = arith.constant 0 : i32
    return %arg0, %c0_i32 : i32, i32
  }
}

module attributes {stable_mosaic.version = 11 : i64} {
  func.func @_erf_loss_kernel(%arg0: i32, %arg1: memref<16xi32, #tpu.memory_space<smem>>, %arg2: memref<8x128xf32, #tpu.memory_space<vmem>>, %arg3: memref<8x128xf32, #tpu.memory_space<vmem>>, %arg4: memref<16x128xf32, #tpu.memory_space<vmem>>, %arg5: memref<8x128xf32, #tpu.memory_space<vmem>>) attributes {dimension_semantics = [#tpu.dimension_semantics<parallel>], iteration_bounds = array<i64: 2>, scalar_prefetch = 1 : i64, scratch_operands = 0 : i64, tpu.core_type = #tpu.core_type<tc>, window_params = [{transform_indices = @transform_0, window_bounds = array<i64: 8, 128>}, {transform_indices = @transform_1, window_bounds = array<i64: 8, 128>}, {pipeline_mode = #tpu.pipeline_mode<synchronous>, transform_indices = @transform_2, window_bounds = array<i64: 16, 128>}, {transform_indices = @transform_3, window_bounds = array<i64: 8, 128>}]} {
    %c0 = arith.constant 0 : index
    %c0_0 = arith.constant 0 : index
    %0 = vector.load %arg2[%c0, %c0_0] : memref<8x128xf32, #tpu.memory_space<vmem>>, vector<8x128xf32>
    %c0_1 = arith.constant 0 : index
    %c0_2 = arith.constant 0 : index
    %1 = vector.load %arg3[%c0_1, %c0_2] : memref<8x128xf32, #tpu.memory_space<vmem>>, vector<8x128xf32>
    %cst = arith.constant 9.99999993E-9 : f32
    %2 = vector.broadcast %cst : f32 to vector<8x128xf32>
    %3 = arith.addf %1, %2 : vector<8x128xf32>
    %cst_3 = arith.constant 0.707106769 : f32
    %4 = vector.broadcast %cst_3 : f32 to vector<8x128xf32>
    %5 = arith.divf %4, %3 : vector<8x128xf32>
    %6 = tpu.iota {dimensions = array<i32: 1>} : vector<1x16xi32>
    %c8_i32 = arith.constant 8 : i32
    %7 = arith.muli %arg0, %c8_i32 : i32
    %c0_i32 = arith.constant 0 : i32
    %8 = arith.addi %7, %c0_i32 : i32
    %9 = arith.index_cast %8 : i32 to index
    %10 = memref.load %arg1[%9] : memref<16xi32, #tpu.memory_space<smem>>
    %11 = vector.broadcast %10 : i32 to vector<1x16xi32>
    %12 = arith.cmpi eq, %6, %11 : vector<1x16xi32>
    %13 = arith.extui %12 : vector<1x16xi1> to vector<1x16xi32>
    %14 = arith.sitofp %13 : vector<1x16xi32> to vector<1x16xf32>
    %c8_i32_4 = arith.constant 8 : i32
    %15 = arith.muli %arg0, %c8_i32_4 : i32
    %c1_i32 = arith.constant 1 : i32
    %16 = arith.addi %15, %c1_i32 : i32
    %17 = arith.index_cast %16 : i32 to index
    %18 = memref.load %arg1[%17] : memref<16xi32, #tpu.memory_space<smem>>
    %19 = vector.broadcast %18 : i32 to vector<1x16xi32>
    %20 = arith.cmpi eq, %6, %19 : vector<1x16xi32>
    %21 = arith.extui %20 : vector<1x16xi1> to vector<1x16xi32>
    %22 = arith.sitofp %21 : vector<1x16xi32> to vector<1x16xf32>
    %c8_i32_5 = arith.constant 8 : i32
    %23 = arith.muli %arg0, %c8_i32_5 : i32
    %c2_i32 = arith.constant 2 : i32
    %24 = arith.addi %23, %c2_i32 : i32
    %25 = arith.index_cast %24 : i32 to index
    %26 = memref.load %arg1[%25] : memref<16xi32, #tpu.memory_space<smem>>
    %27 = vector.broadcast %26 : i32 to vector<1x16xi32>
    %28 = arith.cmpi eq, %6, %27 : vector<1x16xi32>
    %29 = arith.extui %28 : vector<1x16xi1> to vector<1x16xi32>
    %30 = arith.sitofp %29 : vector<1x16xi32> to vector<1x16xf32>
    %c8_i32_6 = arith.constant 8 : i32
    %31 = arith.muli %arg0, %c8_i32_6 : i32
    %c3_i32 = arith.constant 3 : i32
    %32 = arith.addi %31, %c3_i32 : i32
    %33 = arith.index_cast %32 : i32 to index
    %34 = memref.load %arg1[%33] : memref<16xi32, #tpu.memory_space<smem>>
    %35 = vector.broadcast %34 : i32 to vector<1x16xi32>
    %36 = arith.cmpi eq, %6, %35 : vector<1x16xi32>
    %37 = arith.extui %36 : vector<1x16xi1> to vector<1x16xi32>
    %38 = arith.sitofp %37 : vector<1x16xi32> to vector<1x16xf32>
    %c8_i32_7 = arith.constant 8 : i32
    %39 = arith.muli %arg0, %c8_i32_7 : i32
    %c4_i32 = arith.constant 4 : i32
    %40 = arith.addi %39, %c4_i32 : i32
    %41 = arith.index_cast %40 : i32 to index
    %42 = memref.load %arg1[%41] : memref<16xi32, #tpu.memory_space<smem>>
    %43 = vector.broadcast %42 : i32 to vector<1x16xi32>
    %44 = arith.cmpi eq, %6, %43 : vector<1x16xi32>
    %45 = arith.extui %44 : vector<1x16xi1> to vector<1x16xi32>
    %46 = arith.sitofp %45 : vector<1x16xi32> to vector<1x16xf32>
    %c8_i32_8 = arith.constant 8 : i32
    %47 = arith.muli %arg0, %c8_i32_8 : i32
    %c5_i32 = arith.constant 5 : i32
    %48 = arith.addi %47, %c5_i32 : i32
    %49 = arith.index_cast %48 : i32 to index
    %50 = memref.load %arg1[%49] : memref<16xi32, #tpu.memory_space<smem>>
    %51 = vector.broadcast %50 : i32 to vector<1x16xi32>
    %52 = arith.cmpi eq, %6, %51 : vector<1x16xi32>
    %53 = arith.extui %52 : vector<1x16xi1> to vector<1x16xi32>
    %54 = arith.sitofp %53 : vector<1x16xi32> to vector<1x16xf32>
    %c8_i32_9 = arith.constant 8 : i32
    %55 = arith.muli %arg0, %c8_i32_9 : i32
    %c6_i32 = arith.constant 6 : i32
    %56 = arith.addi %55, %c6_i32 : i32
    %57 = arith.index_cast %56 : i32 to index
    %58 = memref.load %arg1[%57] : memref<16xi32, #tpu.memory_space<smem>>
    %59 = vector.broadcast %58 : i32 to vector<1x16xi32>
    %60 = arith.cmpi eq, %6, %59 : vector<1x16xi32>
    %61 = arith.extui %60 : vector<1x16xi1> to vector<1x16xi32>
    %62 = arith.sitofp %61 : vector<1x16xi32> to vector<1x16xf32>
    %c8_i32_10 = arith.constant 8 : i32
    %63 = arith.muli %arg0, %c8_i32_10 : i32
    %c7_i32 = arith.constant 7 : i32
    %64 = arith.addi %63, %c7_i32 : i32
    %65 = arith.index_cast %64 : i32 to index
    %66 = memref.load %arg1[%65] : memref<16xi32, #tpu.memory_space<smem>>
    %67 = vector.broadcast %66 : i32 to vector<1x16xi32>
    %68 = arith.cmpi eq, %6, %67 : vector<1x16xi32>
    %69 = arith.extui %68 : vector<1x16xi1> to vector<1x16xi32>
    %70 = arith.sitofp %69 : vector<1x16xi32> to vector<1x16xf32>
    %71 = tpu.concatenate %14, %22, %30, %38, %46, %54, %62, %70 in 0 : vector<1x16xf32>, vector<1x16xf32>, vector<1x16xf32>, vector<1x16xf32>, vector<1x16xf32>, vector<1x16xf32>, vector<1x16xf32>, vector<1x16xf32> -> vector<8x16xf32>
    %c0_11 = arith.constant 0 : index
    %c0_12 = arith.constant 0 : index
    %72 = vector.load %arg4[%c0_11, %c0_12] : memref<16x128xf32, #tpu.memory_space<vmem>>, vector<16x128xf32>
    %cst_13 = arith.constant dense<0.000000e+00> : vector<8x128xf32>
    %73 = tpu.matmul %71, %72, %cst_13 {dimension_numbers = #tpu.dot_dimension_numbers<[1], [0], [0], [1], [0, 0, 1, 1], [], []>} : vector<8x16xf32>, vector<16x128xf32>, vector<8x128xf32> -> vector<8x128xf32>
    %74 = arith.subf %73, %0 : vector<8x128xf32>
    %75 = math.absf %74 : vector<8x128xf32>
    %76 = arith.mulf %75, %5 : vector<8x128xf32>
    %cst_14 = arith.constant 0.327591091 : f32
    %77 = vector.broadcast %cst_14 : f32 to vector<8x128xf32>
    %78 = arith.mulf %77, %76 : vector<8x128xf32>
    %cst_15 = arith.constant 1.000000e+00 : f32
    %79 = vector.broadcast %cst_15 : f32 to vector<8x128xf32>
    %80 = arith.addf %79, %78 : vector<8x128xf32>
    %81 = tpu.reciprocal %80 {approx = true} : vector<8x128xf32> -> vector<8x128xf32>
    %82 = arith.mulf %80, %81 : vector<8x128xf32>
    %cst_16 = arith.constant 2.000000e+00 : f32
    %83 = vector.broadcast %cst_16 : f32 to vector<8x128xf32>
    %84 = arith.subf %83, %82 : vector<8x128xf32>
    %85 = arith.mulf %81, %84 : vector<8x128xf32>
    %cst_17 = arith.constant 1.06140542 : f32
    %86 = vector.broadcast %cst_17 : f32 to vector<8x128xf32>
    %87 = arith.mulf %86, %85 : vector<8x128xf32>
    %cst_18 = arith.constant -1.45315206 : f32
    %88 = vector.broadcast %cst_18 : f32 to vector<8x128xf32>
    %89 = arith.addf %87, %88 : vector<8x128xf32>
    %90 = arith.mulf %89, %85 : vector<8x128xf32>
    %cst_19 = arith.constant 1.42141378 : f32
    %91 = vector.broadcast %cst_19 : f32 to vector<8x128xf32>
    %92 = arith.addf %90, %91 : vector<8x128xf32>
    %93 = arith.mulf %92, %85 : vector<8x128xf32>
    %cst_20 = arith.constant -0.284496725 : f32
    %94 = vector.broadcast %cst_20 : f32 to vector<8x128xf32>
    %95 = arith.addf %93, %94 : vector<8x128xf32>
    %96 = arith.mulf %95, %85 : vector<8x128xf32>
    %cst_21 = arith.constant 0.254829586 : f32
    %97 = vector.broadcast %cst_21 : f32 to vector<8x128xf32>
    %98 = arith.addf %96, %97 : vector<8x128xf32>
    %99 = arith.mulf %98, %85 : vector<8x128xf32>
    %cst_22 = arith.constant 0.000000e+00 : f32
    %100 = vector.broadcast %cst_22 : f32 to vector<8x128xf32>
    %101 = arith.subf %100, %76 : vector<8x128xf32>
    %102 = arith.mulf %101, %76 : vector<8x128xf32>
    %103 = math.exp %102 : vector<8x128xf32>
    %104 = arith.mulf %99, %103 : vector<8x128xf32>
    %cst_23 = arith.constant 1.000000e+00 : f32
    %105 = vector.broadcast %cst_23 : f32 to vector<8x128xf32>
    %106 = arith.subf %105, %104 : vector<8x128xf32>
    %cst_24 = arith.constant 2.000000e+00 : f32
    %107 = vector.broadcast %cst_24 : f32 to vector<8x128xf32>
    %108 = arith.mulf %107, %106 : vector<8x128xf32>
    %109 = vector.shape_cast %0 : vector<8x128xf32> to vector<8x1x128xf32>
    %110 = vector.shape_cast %5 : vector<8x128xf32> to vector<8x1x128xf32>
    %cst_25 = arith.constant 0.000000e+00 : f32
    %111 = vector.broadcast %cst_25 : f32 to vector<8x128xf32>
    %c0_i32_26 = arith.constant 0 : i32
    %c8_i32_27 = arith.constant 8 : i32
    %112 = arith.muli %c0_i32_26, %c8_i32_27 : i32
    %113 = tpu.assume_multiple %112, 8 : i32
    %114 = arith.index_cast %113 : i32 to index
    %c0_28 = arith.constant 0 : index
    %115 = vector.load %arg4[%114, %c0_28] : memref<16x128xf32, #tpu.memory_space<vmem>>, vector<8x128xf32>
    %116 = vector.shape_cast %115 : vector<8x128xf32> to vector<1x8x128xf32>
    %117 = vector.broadcast %116 : vector<1x8x128xf32> to vector<8x8x128xf32>
    %118 = vector.broadcast %109 : vector<8x1x128xf32> to vector<8x8x128xf32>
    %119 = arith.subf %117, %118 : vector<8x8x128xf32>
    %120 = math.absf %119 : vector<8x8x128xf32>
    %121 = vector.broadcast %110 : vector<8x1x128xf32> to vector<8x8x128xf32>
    %122 = arith.mulf %120, %121 : vector<8x8x128xf32>
    %cst_29 = arith.constant 0.327591091 : f32
    %123 = vector.broadcast %cst_29 : f32 to vector<8x8x128xf32>
    %124 = arith.mulf %123, %122 : vector<8x8x128xf32>
    %cst_30 = arith.constant 1.000000e+00 : f32
    %125 = vector.broadcast %cst_30 : f32 to vector<8x8x128xf32>
    %126 = arith.addf %125, %124 : vector<8x8x128xf32>
    %127 = tpu.reciprocal %126 {approx = true} : vector<8x8x128xf32> -> vector<8x8x128xf32>
    %128 = arith.mulf %126, %127 : vector<8x8x128xf32>
    %cst_31 = arith.constant 2.000000e+00 : f32
    %129 = vector.broadcast %cst_31 : f32 to vector<8x8x128xf32>
    %130 = arith.subf %129, %128 : vector<8x8x128xf32>
    %131 = arith.mulf %127, %130 : vector<8x8x128xf32>
    %cst_32 = arith.constant 1.06140542 : f32
    %132 = vector.broadcast %cst_32 : f32 to vector<8x8x128xf32>
    %133 = arith.mulf %132, %131 : vector<8x8x128xf32>
    %cst_33 = arith.constant -1.45315206 : f32
    %134 = vector.broadcast %cst_33 : f32 to vector<8x8x128xf32>
    %135 = arith.addf %133, %134 : vector<8x8x128xf32>
    %136 = arith.mulf %135, %131 : vector<8x8x128xf32>
    %cst_34 = arith.constant 1.42141378 : f32
    %137 = vector.broadcast %cst_34 : f32 to vector<8x8x128xf32>
    %138 = arith.addf %136, %137 : vector<8x8x128xf32>
    %139 = arith.mulf %138, %131 : vector<8x8x128xf32>
    %cst_35 = arith.constant -0.284496725 : f32
    %140 = vector.broadcast %cst_35 : f32 to vector<8x8x128xf32>
    %141 = arith.addf %139, %140 : vector<8x8x128xf32>
    %142 = arith.mulf %141, %131 : vector<8x8x128xf32>
    %cst_36 = arith.constant 0.254829586 : f32
    %143 = vector.broadcast %cst_36 : f32 to vector<8x8x128xf32>
    %144 = arith.addf %142, %143 : vector<8x8x128xf32>
    %145 = arith.mulf %144, %131 : vector<8x8x128xf32>
    %cst_37 = arith.constant 0.000000e+00 : f32
    %146 = vector.broadcast %cst_37 : f32 to vector<8x8x128xf32>
    %147 = arith.subf %146, %122 : vector<8x8x128xf32>
    %148 = arith.mulf %147, %122 : vector<8x8x128xf32>
    %149 = math.exp %148 : vector<8x8x128xf32>
    %150 = arith.mulf %145, %149 : vector<8x8x128xf32>
    %cst_38 = arith.constant 1.000000e+00 : f32
    %151 = vector.broadcast %cst_38 : f32 to vector<8x8x128xf32>
    %152 = arith.subf %151, %150 : vector<8x8x128xf32>
    %cst_39 = arith.constant dense<0.000000e+00> : vector<8x128xf32>
    %153 = vector.multi_reduction <add>, %152, %cst_39 [1] : vector<8x8x128xf32> to vector<8x128xf32>
    %154 = arith.addf %111, %153 : vector<8x128xf32>
    %c1_i32_40 = arith.constant 1 : i32
    %c8_i32_41 = arith.constant 8 : i32
    %155 = arith.muli %c1_i32_40, %c8_i32_41 : i32
    %156 = tpu.assume_multiple %155, 8 : i32
    %157 = arith.index_cast %156 : i32 to index
    %c0_42 = arith.constant 0 : index
    %158 = vector.load %arg4[%157, %c0_42] : memref<16x128xf32, #tpu.memory_space<vmem>>, vector<8x128xf32>
    %159 = vector.shape_cast %158 : vector<8x128xf32> to vector<1x8x128xf32>
    %160 = vector.broadcast %159 : vector<1x8x128xf32> to vector<8x8x128xf32>
    %161 = vector.broadcast %109 : vector<8x1x128xf32> to vector<8x8x128xf32>
    %162 = arith.subf %160, %161 : vector<8x8x128xf32>
    %163 = math.absf %162 : vector<8x8x128xf32>
    %164 = vector.broadcast %110 : vector<8x1x128xf32> to vector<8x8x128xf32>
    %165 = arith.mulf %163, %164 : vector<8x8x128xf32>
    %cst_43 = arith.constant 0.327591091 : f32
    %166 = vector.broadcast %cst_43 : f32 to vector<8x8x128xf32>
    %167 = arith.mulf %166, %165 : vector<8x8x128xf32>
    %cst_44 = arith.constant 1.000000e+00 : f32
    %168 = vector.broadcast %cst_44 : f32 to vector<8x8x128xf32>
    %169 = arith.addf %168, %167 : vector<8x8x128xf32>
    %170 = tpu.reciprocal %169 {approx = true} : vector<8x8x128xf32> -> vector<8x8x128xf32>
    %171 = arith.mulf %169, %170 : vector<8x8x128xf32>
    %cst_45 = arith.constant 2.000000e+00 : f32
    %172 = vector.broadcast %cst_45 : f32 to vector<8x8x128xf32>
    %173 = arith.subf %172, %171 : vector<8x8x128xf32>
    %174 = arith.mulf %170, %173 : vector<8x8x128xf32>
    %cst_46 = arith.constant 1.06140542 : f32
    %175 = vector.broadcast %cst_46 : f32 to vector<8x8x128xf32>
    %176 = arith.mulf %175, %174 : vector<8x8x128xf32>
    %cst_47 = arith.constant -1.45315206 : f32
    %177 = vector.broadcast %cst_47 : f32 to vector<8x8x128xf32>
    %178 = arith.addf %176, %177 : vector<8x8x128xf32>
    %179 = arith.mulf %178, %174 : vector<8x8x128xf32>
    %cst_48 = arith.constant 1.42141378 : f32
    %180 = vector.broadcast %cst_48 : f32 to vector<8x8x128xf32>
    %181 = arith.addf %179, %180 : vector<8x8x128xf32>
    %182 = arith.mulf %181, %174 : vector<8x8x128xf32>
    %cst_49 = arith.constant -0.284496725 : f32
    %183 = vector.broadcast %cst_49 : f32 to vector<8x8x128xf32>
    %184 = arith.addf %182, %183 : vector<8x8x128xf32>
    %185 = arith.mulf %184, %174 : vector<8x8x128xf32>
    %cst_50 = arith.constant 0.254829586 : f32
    %186 = vector.broadcast %cst_50 : f32 to vector<8x8x128xf32>
    %187 = arith.addf %185, %186 : vector<8x8x128xf32>
    %188 = arith.mulf %187, %174 : vector<8x8x128xf32>
    %cst_51 = arith.constant 0.000000e+00 : f32
    %189 = vector.broadcast %cst_51 : f32 to vector<8x8x128xf32>
    %190 = arith.subf %189, %165 : vector<8x8x128xf32>
    %191 = arith.mulf %190, %165 : vector<8x8x128xf32>
    %192 = math.exp %191 : vector<8x8x128xf32>
    %193 = arith.mulf %188, %192 : vector<8x8x128xf32>
    %cst_52 = arith.constant 1.000000e+00 : f32
    %194 = vector.broadcast %cst_52 : f32 to vector<8x8x128xf32>
    %195 = arith.subf %194, %193 : vector<8x8x128xf32>
    %cst_53 = arith.constant dense<0.000000e+00> : vector<8x128xf32>
    %196 = vector.multi_reduction <add>, %195, %cst_53 [1] : vector<8x8x128xf32> to vector<8x128xf32>
    %197 = arith.addf %154, %196 : vector<8x128xf32>
    %c2_i32_54 = arith.constant 2 : i32
    %198 = arith.subf %108, %197 : vector<8x128xf32>
    %c0_55 = arith.constant 0 : index
    %c0_56 = arith.constant 0 : index
    %199 = vector.load %arg5[%c0_55, %c0_56] : memref<8x128xf32, #tpu.memory_space<vmem>>, vector<8x128xf32>
    tpu.vector_store %arg5[%c0_55, %c0_56], %198 {strides = array<i32>} : memref<8x128xf32, #tpu.memory_space<vmem>>, vector<8x128xf32>,
    return
  }
  func.func @transform_0(%arg0: i32, %arg1: memref<16xi32, #tpu.memory_space<smem>>) -> (i32, i32) {
    %c0_i32 = arith.constant 0 : i32
    %c0_i32_0 = arith.constant 0 : i32
    return %arg0, %c0_i32 : i32, i32
  }
  func.func @transform_1(%arg0: i32, %arg1: memref<16xi32, #tpu.memory_space<smem>>) -> (i32, i32) {
    %c0_i32 = arith.constant 0 : i32
    %c0_i32_0 = arith.constant 0 : i32
    return %arg0, %c0_i32 : i32, i32
  }
  func.func @transform_2(%arg0: i32, %arg1: memref<16xi32, #tpu.memory_space<smem>>) -> (i32, i32) {
    %c0_i32 = arith.constant 0 : i32
    %c0_i32_0 = arith.constant 0 : i32
    %c0_i32_1 = arith.constant 0 : i32
    return %c0_i32, %c0_i32_0 : i32, i32
  }
  func.func @transform_3(%arg0: i32, %arg1: memref<16xi32, #tpu.memory_space<smem>>) -> (i32, i32) {
    %c0_i32 = arith.constant 0 : i32
    %c0_i32_0 = arith.constant 0 : i32
    return %arg0, %c0_i32 : i32, i32
  }
}

</mosaic_0001>

<llo_original>
// kernel: tpu_custom_call.1
$region0: #{tpu_custom_call.1}
  #allocation0 [shape = 'u32[]', space=smem, size = 0x4, offset = 0x4, fixed_abs, tag = 'smem constant byte address 0x4 - core index']
  #allocation1 [shape = 'u32[72,128]{1,0:T(1,128)}', space=vmem, size = 0x9000, scoped, tag = 'internal scratch']
  #allocation2 [shape = 's32[1]{0}', space=sflag, size = 0x4, scoped, tag = 'scoped memory for tpu_custom_call.1']
  #allocation3 [shape = 'u8[512]{0}', space=smem, size = 0x200, scoped, tag = 'prefetched SMEM operand 0']
  %s0 = inlined_call_operand.hbm [shape: s32[16], index: 0, kind: input, shape index: {}]
  %s1 = inlined_call_operand.hbm [shape: f32[16,128], index: 1, kind: input, shape index: {}]
  %s2 = inlined_call_operand.hbm [shape: f32[16,128], index: 2, kind: input, shape index: {}]
  %s3 = inlined_call_operand.hbm [shape: f32[16,128], index: 3, kind: input, shape index: {}]
  %s4 = inlined_call_operand.hbm [shape: f32[16,128], index: 4, kind: output, shape index: {}]
  %s5 = sld [smem:[#allocation0]]
  $region57: #{tpu_custom_call.1} parent=0
    _
  %s7 = ssub.s32 1, %s5
  %s8 = scalar_select 0, %s7, %s5
  %s10 = sshll.u32 %s0, 4
  %s11 = int_to_ptr.hbm [resolvable:$true] %s10
  %13 = dma.hbm_to_smem %s11, 16, [#allocation3], [#allocation2]
  %15 = dma.done [#allocation2], 16
  %16 = sfence
  $region1: #{tpu_custom_call.1} parent=0
    #allocation4 [shape = 'u8[8192]{0}', space=vmem, size = 0x2000, scoped, tag = 'input window, operand 1']
    #allocation5 [shape = 's32[2]{0}', space=sflag, size = 0x8, scoped, tag = 'scoped memory for tpu_custom_call.1']
    #allocation6 [shape = 's32[2]{0}', space=sflag, size = 0x8, scoped, tag = 'scoped memory for tpu_custom_call.1']
    #allocation7 [shape = 'u8[8192]{0}', space=vmem, size = 0x2000, scoped, tag = 'input window, operand 2']
    #allocation8 [shape = 's32[2]{0}', space=sflag, size = 0x8, scoped, tag = 'scoped memory for tpu_custom_call.1']
    #allocation9 [shape = 'u8[8192]{0}', space=vmem, size = 0x2000, scoped, tag = 'input window, operand 3, single buffered']
    #allocation10 [shape = 'u8[8192]{0}', space=vmem, size = 0x2000, scoped, tag = 'output window, operand 0']
    %17 = vsyncpa [#allocation5], 0
    %s18 = scalar_lea.sflag [#allocation5], 1
    %19 = vsyncpa %s18, 0
    %20 = vsyncpa [#allocation8], 0
    %s21 = scalar_lea.sflag [#allocation8], 1
    %22 = vsyncpa %s21, 0
    %23 = vsyncpa [#allocation6], 0
    %s24 = scalar_lea.sflag [#allocation6], 1
    %25 = vsyncpa %s24, 0
    loop: start=0, step=1, limit=4
    $region2: #{tpu_custom_call.1} parent=1 // loop_pre_header
      _
    $region3: #{tpu_custom_call.1} parent=1 // loop_header
      %s27 = sphi 0, %s31
      %p28 = scmp.ge.s32.totalorder %s27, 4
      %s37 = sphi 0, %s39
      %s40 = sphi 0, %s37
      %s41 = sphi 0, %s40
      %s57 = sphi 0, %s41
      %s63 = sphi 0, %s65
      %s66 = sphi 0, %s63
      %s67 = sphi 0, %s66
      %s83 = sphi 0, %s67
      %s87 = sphi 0, %s87
      %s89 = sphi 0, %s87
      %s90 = sphi 0, %s89
      %s104 = sphi 0, %s90
      %s110 = sphi 0, %s112
      %s113 = sphi 0, %s110
      %s114 = sphi 0, %s113
      %s130 = sphi 0, %s114
    $region4: #{tpu_custom_call.1} parent=1 // loop_header_branch
      %30 = sbr.rel (%p28) target = $region8
    $region5: #{tpu_custom_call.1} parent=1 // loop_body
      %s32 = ssub.s32 %s27, 1
      %s33 = ssub.s32 %s27, 2
      %s34 = sadd.s32 %s27, 1
      %s35 = ssub.s32 %s27, %s34
      %p36 = scmp.eq.s32.totalorder %s35, 0
      %s38 = sadd.s32 %s37, 1
      %s39 = scalar_select %p36, %s37, %s38
      %p42 = pneg %p36
      %p43 = scmp.eq.s32.totalorder %s27, 1
      %p44 = por %p42, %p43
      %p45 = scmp.ne.s32.totalorder %s37, %s40
      %p46 = scmp.eq.s32.totalorder %s27, 0
      %p47 = por %p45, %p46
      %p48 = scmp.ne.s32.totalorder %s37, %s40
      %p49 = scmp.eq.s32.totalorder %s32, 1
      %p50 = por %p48, %p49
      %p51 = scmp.ne.s32.totalorder %s40, %s41
      %p52 = scmp.eq.s32.totalorder %s32, 0
      %p53 = por %p51, %p52
      %p54 = scmp.ne.s32.totalorder %s40, %s41
      %p55 = scmp.eq.s32.totalorder %s33, 1
      %p56 = por %p54, %p55
      %p58 = scmp.ne.s32.totalorder %s41, %s57
      %p59 = scmp.eq.s32.totalorder %s33, 0
      %p60 = por %p58, %p59
      %s61 = ssub.s32 %s27, %s34
      %p62 = scmp.eq.s32.totalorder %s61, 0
      %s64 = sadd.s32 %s63, 1
      %s65 = scalar_select %p62, %s63, %s64
      %p68 = pneg %p62
      %p69 = scmp.eq.s32.totalorder %s27, 1
      %p70 = por %p68, %p69
      %p71 = scmp.ne.s32.totalorder %s63, %s66
      %p72 = scmp.eq.s32.totalorder %s27, 0
      %p73 = por %p71, %p72
      %p74 = scmp.ne.s32.totalorder %s63, %s66
      %p75 = scmp.eq.s32.totalorder %s32, 1
      %p76 = por %p74, %p75
      %p77 = scmp.ne.s32.totalorder %s66, %s67
      %p78 = scmp.eq.s32.totalorder %s32, 0
      %p79 = por %p77, %p78
      %p80 = scmp.ne.s32.totalorder %s66, %s67
      %p81 = scmp.eq.s32.totalorder %s33, 1
      %p82 = por %p80, %p81
      %p84 = scmp.ne.s32.totalorder %s67, %s83
      %p85 = scmp.eq.s32.totalorder %s33, 0
      %p86 = por %p84, %p85
      %s88 = sadd.s32 %s87, 1
      %p91 = scmp.eq.s32.totalorder %s27, 1
      %p92 = scmp.ne.s32.totalorder %s87, %s89
      %p93 = scmp.eq.s32.totalorder %s27, 0
      %p94 = por %p92, %p93
      %p95 = scmp.ne.s32.totalorder %s87, %s89
      %p96 = scmp.eq.s32.totalorder %s32, 1
      %p97 = por %p95, %p96
      %p98 = scmp.ne.s32.totalorder %s89, %s90
      %p99 = scmp.eq.s32.totalorder %s32, 0
      %p100 = por %p98, %p99
      %p101 = scmp.ne.s32.totalorder %s89, %s90
      %p102 = scmp.eq.s32.totalorder %s33, 1
      %p103 = por %p101, %p102
      %p105 = scmp.ne.s32.totalorder %s90, %s104
      %p106 = scmp.eq.s32.totalorder %s33, 0
      %p107 = por %p105, %p106
      %s108 = ssub.s32 %s27, %s34
      %p109 = scmp.eq.s32.totalorder %s108, 0
      %s111 = sadd.s32 %s110, 1
      %s112 = scalar_select %p109, %s110, %s111
      %p115 = pneg %p109
      %p116 = scmp.eq.s32.totalorder %s27, 1
      %p117 = por %p115, %p116
      %p118 = scmp.ne.s32.totalorder %s110, %s113
      %p119 = scmp.eq.s32.totalorder %s27, 0
      %p120 = por %p118, %p119
      %p121 = scmp.ne.s32.totalorder %s110, %s113
      %p122 = scmp.eq.s32.totalorder %s32, 1
      %p123 = por %p121, %p122
      %p124 = scmp.ne.s32.totalorder %s113, %s114
      %p125 = scmp.eq.s32.totalorder %s32, 0
      %p126 = por %p124, %p125
      %p127 = scmp.ne.s32.totalorder %s113, %s114
      %p128 = scmp.eq.s32.totalorder %s33, 1
      %p129 = por %p127, %p128
      %p131 = scmp.ne.s32.totalorder %s114, %s130
      %p132 = scmp.eq.s32.totalorder %s33, 0
      %p133 = por %p131, %p132
      %p134 = scmp.le.s32.totalorder 1, %s27
      %p135 = scmp.lt.s32.totalorder %s27, 3
      %p136 = pnand %p134, %p135
      %p137 = pneg %p136
      // Predicated region
      $region9: #{tpu_custom_call.1} parent=5 // pred_check
        _
      $region10: #{tpu_custom_call.1} parent=5 // pred_check_branch
        %139 = sbr.rel (%p136) target = $region12
      $region11: #{tpu_custom_call.1} parent=5 // pred_region
        %s140 = ssub.s32 %s27, 1
        // Predicated region
        $region13: #{tpu_custom_call.1} parent=11 // pred_check
          %p141 = pneg %p100
        $region14: #{tpu_custom_call.1} parent=11 // pred_check_branch
          %143 = sbr.rel (%p141) target = $region16
        $region15: #{tpu_custom_call.1} parent=11 // pred_region
          %145 = vsyncadd [#allocation8], 0
          %s146 = sshll.u32 %s3, 4
          %s147 = int_to_ptr.hbm [resolvable:$true] %s146
          %s148 = sshll.u32 [#allocation9], 4
          %s149 = int_to_ptr.vmem [resolvable:$true] %s148
          %154 = dma.hbm_to_vmem [thread:$0]  %s147, 256, %s149, [#allocation8], 128, 128, 8
        $region16: #{tpu_custom_call.1} parent=11 // pred_fallthru
          _
      $region12: #{tpu_custom_call.1} parent=5 // pred_fallthru
        _
      %p155 = scmp.lt.s32.totalorder %s27, 2
      // Predicated region
      $region17: #{tpu_custom_call.1} parent=5 // pred_check
        %p156 = pneg %p155
      $region18: #{tpu_custom_call.1} parent=5 // pred_check_branch
        %158 = sbr.rel (%p156) target = $region20
      $region19: #{tpu_custom_call.1} parent=5 // pred_region
        // Predicated region
        $region21: #{tpu_custom_call.1} parent=19 // pred_check
          %p159 = pneg %p47
        $region22: #{tpu_custom_call.1} parent=19 // pred_check_branch
          %161 = sbr.rel (%p159) target = $region24
        $region23: #{tpu_custom_call.1} parent=19 // pred_region
          %s162 = sand.u32 %s37, 1
          %s163 = scalar_lea.sflag [#allocation5], %s162
          %s164 = sand.u32 %s37, 1
          %s165 = smul.addr %s164, 8
          %s166 = scalar_lea.vmem [#allocation4], %s165
          %168 = vsyncadd %s163, 0
          %s169 = smul.addr %s27, 8
          %s170 = scalar_lea.hbm %s1, %s169
          %s172 = sshll.u32 %s170, 4
          %s173 = int_to_ptr.hbm [resolvable:$true] %s172
          %s174 = sshll.u32 %s166, 4
          %s175 = int_to_ptr.vmem [resolvable:$true] %s174
          %177 = dma.hbm_to_vmem [thread:$0]  %s173, 128, %s175, %s163
        $region24: #{tpu_custom_call.1} parent=19 // pred_fallthru
          _
        // Predicated region
        $region25: #{tpu_custom_call.1} parent=19 // pred_check
          %p178 = pneg %p73
        $region26: #{tpu_custom_call.1} parent=19 // pred_check_branch
          %180 = sbr.rel (%p178) target = $region28
        $region27: #{tpu_custom_call.1} parent=19 // pred_region
          %s181 = sand.u32 %s27, 1
          %s182 = scalar_lea.sflag [#allocation8], %s181
          %s183 = sand.u32 %s63, 1
          %s184 = smul.addr %s183, 8
          %s185 = scalar_lea.vmem [#allocation7], %s184
          %187 = vsyncadd %s182, 0
          %s188 = smul.addr %s27, 8
          %s189 = scalar_lea.hbm %s2, %s188
          %s191 = sshll.u32 %s189, 4
          %s192 = int_to_ptr.hbm [resolvable:$true] %s191
          %s193 = sshll.u32 %s185, 4
          %s194 = int_to_ptr.vmem [resolvable:$true] %s193
          %196 = dma.hbm_to_vmem [thread:$0]  %s192, 128, %s194, %s182
        $region28: #{tpu_custom_call.1} parent=19 // pred_fallthru
          _
      $region20: #{tpu_custom_call.1} parent=5 // pred_fallthru
        _
      %p197 = scmp.le.s32.totalorder 1, %s27
      %p198 = scmp.lt.s32.totalorder %s27, 3
      %p199 = pnand %p197, %p198
      %p200 = pneg %p199
      // Predicated region
      $region29: #{tpu_custom_call.1} parent=5 // pred_check
        _
      $region30: #{tpu_custom_call.1} parent=5 // pred_check_branch
        %202 = sbr.rel (%p199) target = $region32
      $region31: #{tpu_custom_call.1} parent=5 // pred_region
        %s203 = ssub.s32 %s27, 1
        %s204 = sand.u32 %s40, 1
        %s205 = scalar_lea.sflag [#allocation5], %s204
        %s206 = sand.u32 %s40, 1
        %s207 = smul.addr %s206, 8
        %s208 = scalar_lea.vmem [#allocation4], %s207
        // Predicated region
        $region33: #{tpu_custom_call.1} parent=31 // pred_check
          %p209 = pneg %p53
        $region34: #{tpu_custom_call.1} parent=31 // pred_check_branch
          %211 = sbr.rel (%p209) target = $region36
        $region35: #{tpu_custom_call.1} parent=31 // pred_region
          %213 = dma.done %s205, 128
        $region36: #{tpu_custom_call.1} parent=31 // pred_fallthru
          _
        %s214 = sand.u32 %s32, 1
        %s215 = scalar_lea.sflag [#allocation8], %s214
        %s216 = sand.u32 %s66, 1
        %s217 = smul.addr %s216, 8
        %s218 = scalar_lea.vmem [#allocation7], %s217
        // Predicated region
        $region37: #{tpu_custom_call.1} parent=31 // pred_check
          %p219 = pneg %p79
        $region38: #{tpu_custom_call.1} parent=31 // pred_check_branch
          %221 = sbr.rel (%p219) target = $region40
        $region39: #{tpu_custom_call.1} parent=31 // pred_region
          %223 = dma.done %s215, 128
        $region40: #{tpu_custom_call.1} parent=31 // pred_fallthru
          _
        // Predicated region
        $region41: #{tpu_custom_call.1} parent=31 // pred_check
          %p224 = pneg %p100
        $region42: #{tpu_custom_call.1} parent=31 // pred_check_branch
          %226 = sbr.rel (%p224) target = $region44
        $region43: #{tpu_custom_call.1} parent=31 // pred_region
          %228 = dma.done [#allocation8], 256
        $region44: #{tpu_custom_call.1} parent=31 // pred_fallthru
          _
        %s229 = sand.u32 %s40, 1
        %s230 = scalar_lea.sflag [#allocation5], %s229
        %s231 = sand.u32 %s40, 1
        %s232 = smul.addr %s231, 8
        %s233 = scalar_lea.vmem [#allocation4], %s232
        %p234 = pneg %p53
        %p235 = pneg %p50
        %s236 = sand.u32 %s32, 1
        %s237 = scalar_lea.sflag [#allocation8], %s236
        %s238 = sand.u32 %s66, 1
        %s239 = smul.addr %s238, 8
        %s240 = scalar_lea.vmem [#allocation7], %s239
        %p241 = pneg %p79
        %p242 = pneg %p76
        %p243 = pneg %p100
        %p244 = pneg %p97
        %p245 = pneg %p126
        %p246 = pneg %p123
        %s247 = sand.u32 %s113, 1
        %s248 = scalar_lea.sflag [#allocation6], %s247
        %s249 = sand.u32 %s113, 1
        %s250 = smul.addr %s249, 8
        %s251 = scalar_lea.vmem [#allocation10], %s250
        %v252 = vld [vmem:[%s208] sm:$0xff]
        %v253 = vld [vmem:[%s218] sm:$0xff]
        %v254 = vadd.f32 %v253, 1e-08
        %v255 = vrcp.pop %v254
        %v256 = vmul.f32 %v254, %v255
        %v257 = vsub.f32 1.0, %v256
        %v258 = vmul.f32 %v255, %v257
        %v259 = vadd.f32 %v255, %v258
        %vm260 = vweird.f32 %v254
        %vm261 = vweird.f32 %v255
        %vm262 = vmor %vm260, %vm261
        %v263 = vsel %vm262, %v255, %v259
        %v264 = vand.u32 2147483647, %v254
        %vm265 = vcmp.eq.f32.partialorder %v264, 8.507059e+37
        %v266 = vand.u32 %v254, 2147483648
        %v267 = vor.u32 1.1754944e-38, %v266
        %v268 = vsel %vm265, %v267, %v263
        %v269 = vmul.f32 0.70710677, %v268
        %v270 = vlaneseq
        %v271 = vand.u32 %v270, 127
        %s272 = smul.u32 %s32, 8
        %s273 = sld [smem:[#allocation3 + %s272]]
        %v274 = vstv %s273
        %vm275 = vcmp.eq.s32.totalorder %v271, %v274
        %v276 = vsel %vm275, 1, 0
        %v277 = vcvt.s32.f32 %v276
        %s278 = sadd.s32 %s272, 1
        %s279 = sld [smem:[#allocation3 + %s278]]
        %v280 = vstv %s279
        %vm281 = vcmp.eq.s32.totalorder %v271, %v280
        %v282 = vsel %vm281, 1, 0
        %v283 = vcvt.s32.f32 %v282
        %s284 = sadd.s32 %s272, 2
        %s285 = sld [smem:[#allocation3 + %s284]]
        %v286 = vstv %s285
        %vm287 = vcmp.eq.s32.totalorder %v271, %v286
        %v288 = vsel %vm287, 1, 0
        %v289 = vcvt.s32.f32 %v288
        %s290 = sadd.s32 %s272, 3
        %s291 = sld [smem:[#allocation3 + %s290]]
        %v292 = vstv %s291
        %vm293 = vcmp.eq.s32.totalorder %v271, %v292
        %v294 = vsel %vm293, 1, 0
        %v295 = vcvt.s32.f32 %v294
        %s296 = sadd.s32 %s272, 4
        %s297 = sld [smem:[#allocation3 + %s296]]
        %v298 = vstv %s297
        %vm299 = vcmp.eq.s32.totalorder %v271, %v298
        %v300 = vsel %vm299, 1, 0
        %v301 = vcvt.s32.f32 %v300
        %s302 = sadd.s32 %s272, 5
        %s303 = sld [smem:[#allocation3 + %s302]]
        %v304 = vstv %s303
        %vm305 = vcmp.eq.s32.totalorder %v271, %v304
        %v306 = vsel %vm305, 1, 0
        %v307 = vcvt.s32.f32 %v306
        %s308 = sadd.s32 %s272, 6
        %s309 = sld [smem:[#allocation3 + %s308]]
        %v310 = vstv %s309
        %vm311 = vcmp.eq.s32.totalorder %v271, %v310
        %v312 = vsel %vm311, 1, 0
        %v313 = vcvt.s32.f32 %v312
        %s314 = sadd.s32 %s272, 7
        %s315 = sld [smem:[#allocation3 + %s314]]
        %v316 = vstv %s315
        %vm317 = vcmp.eq.s32.totalorder %v271, %v316
        %v318 = vsel %vm317, 1, 0
        %v319 = vcvt.s32.f32 %v318
        %vm320 = vcmask 1040384
        %v321 = vsel %vm320, %v277, %v283
        %vm322 = vcmask 1041408
        %v323 = vsel %vm322, %v321, %v289
        %vm324 = vcmask 1042432
        %v325 = vsel %vm324, %v323, %v295
        %vm326 = vcmask 1043456
        %v327 = vsel %vm326, %v325, %v301
        %vm328 = vcmask 1044480
        %v329 = vsel %vm328, %v327, %v307
        %vm330 = vcmask 1045504
        %v331 = vsel %vm330, %v329, %v313
        %vm332 = vcmask 1046528
        %v333 = vsel %vm332, %v331, %v319
        %v334 = vld [vmem:[#allocation9] sm:$0xff]
        %v335 = vld [vmem:[#allocation9 + $0x8] sm:$0xff]
        %vm336 = vcmask 130048
        %v338 = vsel %vm336, %v333, 0
        %340 = vmatpush.msra.mxu0 0.0
        %341 = vmatpush.msra.mxu0 0.0
        %342 = vmatpush.msra.mxu0 0.0
        %343 = vmatpush.msra.mxu0 0.0
        %344 = vmatpush.msra.mxu0 0.0
        %345 = vmatpush.msra.mxu0 0.0
        %346 = vmatpush.msra.mxu0 0.0
        %347 = vmatpush.msra.mxu0 0.0
        %348 = vmatpush.msra.mxu0 0.0
        %349 = vmatpush.msra.mxu0 0.0
        %350 = vmatpush.msra.mxu0 0.0
        %351 = vmatpush.msra.mxu0 0.0
        %352 = vmatpush.msra.mxu0 0.0
        %353 = vmatpush.msra.mxu0 0.0
        %354 = vmatpush.msra.mxu0 %v335
        %355 = vmatpush.msra.mxu0 %v334
        %356 = vmatmul.f32.gmra.mxu0 %v338
        %v357 = vpop.f32.mrf.mxu0
        %v358 = vadd.f32 0.0, %v357
        %359 = vdwg.mxu0
        %v360 = vsub.f32 %v358, %v252
        %v361 = vand.u32 2147483647, %v360
        %v362 = vmul.f32 %v361, %v269
        %v363 = vmul.f32 %v362, 0.3275911
        %v364 = vadd.f32 %v363, 1.0
        %v365 = vrcp.pop %v364
        %v366 = vmul.f32 %v364, %v365
        %v367 = vsub.f32 2.0, %v366
        %v368 = vmul.f32 %v365, %v367
        %v369 = vmul.f32 %v368, 1.0614054
        %v370 = vadd.f32 %v369, -1.4531521
        %v371 = vmul.f32 %v370, %v368
        %v372 = vadd.f32 %v371, 1.4214138
        %v373 = vmul.f32 %v372, %v368
        %v374 = vadd.f32 %v373, -0.28449672
        %v375 = vmul.f32 %v374, %v368
        %v376 = vadd.f32 %v375, 0.2548296
        %v377 = vmul.f32 %v376, %v368
        %v378 = vsub.f32 0.0, %v362
        %v379 = vmul.f32 %v378, %v362
        %v380 = vmul.f32 %v379, 1.442695
        %v381 = vpow.pop %v380
        %v382 = vmul.f32 %v377, %v381
        %v383 = vsub.f32 1.0, %v382
        %v384 = vmul.f32 %v383, 2.0
        %v386 = vrot.slane %v252, 1
        %v387 = vrot.slane %v252, 2
        %v388 = vrot.slane %v252, 3
        %v389 = vrot.slane %v252, 4
        %v390 = vrot.slane %v252, 5
        %v391 = vrot.slane %v252, 6
        %v392 = vrot.slane %v252, 7
        %v394 = vrot.slane %v269, 1
        %v395 = vrot.slane %v269, 2
        %v396 = vrot.slane %v269, 3
        %v397 = vrot.slane %v269, 4
        %v398 = vrot.slane %v269, 5
        %v399 = vrot.slane %v269, 6
        %v400 = vrot.slane %v269, 7
        %v401 = vld [vmem:[#allocation9] sm:$0xff]
        %v402 = vperm.slane %v252, 0
        %v403 = vperm.slane %v386, 0
        %v404 = vperm.slane %v387, 0
        %v405 = vperm.slane %v388, 0
        %v406 = vperm.slane %v389, 0
        %v407 = vperm.slane %v390, 0
        %v408 = vperm.slane %v391, 0
        %v409 = vperm.slane %v392, 0
        %v418 = vsub.f32 %v401, %v402
        %v419 = vsub.f32 %v401, %v403
        %v420 = vsub.f32 %v401, %v404
        %v421 = vsub.f32 %v401, %v405
        %v422 = vsub.f32 %v401, %v406
        %v423 = vsub.f32 %v401, %v407
        %v424 = vsub.f32 %v401, %v408
        %v425 = vsub.f32 %v401, %v409
        %v426 = vand.u32 2147483647, %v418
        %v427 = vand.u32 2147483647, %v419
        %v428 = vand.u32 2147483647, %v420
        %v429 = vand.u32 2147483647, %v421
        %v430 = vand.u32 2147483647, %v422
        %v431 = vand.u32 2147483647, %v423
        %v432 = vand.u32 2147483647, %v424
        %v433 = vand.u32 2147483647, %v425
        %v434 = vperm.slane %v269, 0
        %v435 = vperm.slane %v394, 0
        %v436 = vperm.slane %v395, 0
        %v437 = vperm.slane %v396, 0
        %v438 = vperm.slane %v397, 0
        %v439 = vperm.slane %v398, 0
        %v440 = vperm.slane %v399, 0
        %v441 = vperm.slane %v400, 0
        %v450 = vmul.f32 %v426, %v434
        %v451 = vmul.f32 %v427, %v435
        %v452 = vmul.f32 %v428, %v436
        %v453 = vmul.f32 %v429, %v437
        %v454 = vmul.f32 %v430, %v438
        %v455 = vmul.f32 %v431, %v439
        %v456 = vmul.f32 %v432, %v440
        %v457 = vmul.f32 %v433, %v441
        %v458 = vmul.f32 %v450, 0.3275911
        %v459 = vmul.f32 %v451, 0.3275911
        %v460 = vmul.f32 %v452, 0.3275911
        %v461 = vmul.f32 %v453, 0.3275911
        %v462 = vmul.f32 %v454, 0.3275911
        %v463 = vmul.f32 %v455, 0.3275911
        %v464 = vmul.f32 %v456, 0.3275911
        %v465 = vmul.f32 %v457, 0.3275911
        %v466 = vadd.f32 %v458, 1.0
        %v467 = vadd.f32 %v459, 1.0
        %v468 = vadd.f32 %v460, 1.0
        %v469 = vadd.f32 %v461, 1.0
        %v470 = vadd.f32 %v462, 1.0
        %v471 = vadd.f32 %v463, 1.0
        %v472 = vadd.f32 %v464, 1.0
        %v473 = vadd.f32 %v465, 1.0
        %v474 = vrcp.pop %v466
        %v475 = vrcp.pop %v467
        %v476 = vrcp.pop %v468
        %v477 = vrcp.pop %v469
        %v478 = vrcp.pop %v470
        %v479 = vrcp.pop %v471
        %v480 = vrcp.pop %v472
        %v481 = vrcp.pop %v473
        %v482 = vmul.f32 %v466, %v474
        %v483 = vmul.f32 %v467, %v475
        %v484 = vmul.f32 %v468, %v476
        %v485 = vmul.f32 %v469, %v477
        %v486 = vmul.f32 %v470, %v478
        %v487 = vmul.f32 %v471, %v479
        %v488 = vmul.f32 %v472, %v480
        %v489 = vmul.f32 %v473, %v481
        %v490 = vsub.f32 2.0, %v482
        %v491 = vsub.f32 2.0, %v483
        %v492 = vsub.f32 2.0, %v484
        %v493 = vsub.f32 2.0, %v485
        %v494 = vsub.f32 2.0, %v486
        %v495 = vsub.f32 2.0, %v487
        %v496 = vsub.f32 2.0, %v488
        %v497 = vsub.f32 2.0, %v489
        %v498 = vmul.f32 %v474, %v490
        %v499 = vmul.f32 %v475, %v491
        %v500 = vmul.f32 %v476, %v492
        %v501 = vmul.f32 %v477, %v493
        %v502 = vmul.f32 %v478, %v494
        %v503 = vmul.f32 %v479, %v495
        %v504 = vmul.f32 %v480, %v496
        %v505 = vmul.f32 %v481, %v497
        %v506 = vmul.f32 %v498, 1.0614054
        %v507 = vmul.f32 %v499, 1.0614054
        %v508 = vmul.f32 %v500, 1.0614054
        %v509 = vmul.f32 %v501, 1.0614054
        %v510 = vmul.f32 %v502, 1.0614054
        %v511 = vmul.f32 %v503, 1.0614054
        %v512 = vmul.f32 %v504, 1.0614054
        %v513 = vmul.f32 %v505, 1.0614054
        %v514 = vadd.f32 %v506, -1.4531521
        %v515 = vadd.f32 %v507, -1.4531521
        %v516 = vadd.f32 %v508, -1.4531521
        %v517 = vadd.f32 %v509, -1.4531521
        %v518 = vadd.f32 %v510, -1.4531521
        %v519 = vadd.f32 %v511, -1.4531521
        %v520 = vadd.f32 %v512, -1.4531521
        %v521 = vadd.f32 %v513, -1.4531521
        %v522 = vmul.f32 %v514, %v498
        %v523 = vmul.f32 %v515, %v499
        %v524 = vmul.f32 %v516, %v500
        %v525 = vmul.f32 %v517, %v501
        %v526 = vmul.f32 %v518, %v502
        %v527 = vmul.f32 %v519, %v503
        %v528 = vmul.f32 %v520, %v504
        %v529 = vmul.f32 %v521, %v505
        %v530 = vadd.f32 %v522, 1.4214138
        %v531 = vadd.f32 %v523, 1.4214138
        %v532 = vadd.f32 %v524, 1.4214138
        %v533 = vadd.f32 %v525, 1.4214138
        %v534 = vadd.f32 %v526, 1.4214138
        %v535 = vadd.f32 %v527, 1.4214138
        %v536 = vadd.f32 %v528, 1.4214138
        %v537 = vadd.f32 %v529, 1.4214138
        %v538 = vmul.f32 %v530, %v498
        %v539 = vmul.f32 %v531, %v499
        %v540 = vmul.f32 %v532, %v500
        %v541 = vmul.f32 %v533, %v501
        %v542 = vmul.f32 %v534, %v502
        %v543 = vmul.f32 %v535, %v503
        %v544 = vmul.f32 %v536, %v504
        %v545 = vmul.f32 %v537, %v505
        %v546 = vadd.f32 %v538, -0.28449672
        %v547 = vadd.f32 %v539, -0.28449672
        %v548 = vadd.f32 %v540, -0.28449672
        %v549 = vadd.f32 %v541, -0.28449672
        %v550 = vadd.f32 %v542, -0.28449672
        %v551 = vadd.f32 %v543, -0.28449672
        %v552 = vadd.f32 %v544, -0.28449672
        %v553 = vadd.f32 %v545, -0.28449672
        %v554 = vmul.f32 %v546, %v498
        %v555 = vmul.f32 %v547, %v499
        %v556 = vmul.f32 %v548, %v500
        %v557 = vmul.f32 %v549, %v501
        %v558 = vmul.f32 %v550, %v502
        %v559 = vmul.f32 %v551, %v503
        %v560 = vmul.f32 %v552, %v504
        %v561 = vmul.f32 %v553, %v505
        %v562 = vadd.f32 %v554, 0.2548296
        %v563 = vadd.f32 %v555, 0.2548296
        %v564 = vadd.f32 %v556, 0.2548296
        %v565 = vadd.f32 %v557, 0.2548296
        %v566 = vadd.f32 %v558, 0.2548296
        %v567 = vadd.f32 %v559, 0.2548296
        %v568 = vadd.f32 %v560, 0.2548296
        %v569 = vadd.f32 %v561, 0.2548296
        %v570 = vmul.f32 %v562, %v498
        %v571 = vmul.f32 %v563, %v499
        %v572 = vmul.f32 %v564, %v500
        %v573 = vmul.f32 %v565, %v501
        %v574 = vmul.f32 %v566, %v502
        %v575 = vmul.f32 %v567, %v503
        %v576 = vmul.f32 %v568, %v504
        %v577 = vmul.f32 %v569, %v505
        %v578 = vsub.f32 0.0, %v450
        %v579 = vsub.f32 0.0, %v451
        %v580 = vsub.f32 0.0, %v452
        %v581 = vsub.f32 0.0, %v453
        %v582 = vsub.f32 0.0, %v454
        %v583 = vsub.f32 0.0, %v455
        %v584 = vsub.f32 0.0, %v456
        %v585 = vsub.f32 0.0, %v457
        %v586 = vmul.f32 %v578, %v450
        %v587 = vmul.f32 %v579, %v451
        %v588 = vmul.f32 %v580, %v452
        %v589 = vmul.f32 %v581, %v453
        %v590 = vmul.f32 %v582, %v454
        %v591 = vmul.f32 %v583, %v455
        %v592 = vmul.f32 %v584, %v456
        %v593 = vmul.f32 %v585, %v457
        %v594 = vmul.f32 %v586, 1.442695
        %v595 = vpow.pop %v594
        %v596 = vmul.f32 %v587, 1.442695
        %v597 = vpow.pop %v596
        %v598 = vmul.f32 %v588, 1.442695
        %v599 = vpow.pop %v598
        %v600 = vmul.f32 %v589, 1.442695
        %v601 = vpow.pop %v600
        %v602 = vmul.f32 %v590, 1.442695
        %v603 = vpow.pop %v602
        %v604 = vmul.f32 %v591, 1.442695
        %v605 = vpow.pop %v604
        %v606 = vmul.f32 %v592, 1.442695
        %v607 = vpow.pop %v606
        %v608 = vmul.f32 %v593, 1.442695
        %v609 = vpow.pop %v608
        %v610 = vmul.f32 %v570, %v595
        %v611 = vmul.f32 %v571, %v597
        %v612 = vmul.f32 %v572, %v599
        %v613 = vmul.f32 %v573, %v601
        %v614 = vmul.f32 %v574, %v603
        %v615 = vmul.f32 %v575, %v605
        %v616 = vmul.f32 %v576, %v607
        %v617 = vmul.f32 %v577, %v609
        %v618 = vsub.f32 1.0, %v610
        %v619 = vsub.f32 1.0, %v611
        %v620 = vsub.f32 1.0, %v612
        %v621 = vsub.f32 1.0, %v613
        %v622 = vsub.f32 1.0, %v614
        %v623 = vsub.f32 1.0, %v615
        %v624 = vsub.f32 1.0, %v616
        %v625 = vsub.f32 1.0, %v617
        %v626 = vrot.slane %v618, 4
        %v627 = vadd.f32 %v618, %v626
        %v628 = vrot.slane %v627, 2
        %v629 = vadd.f32 %v627, %v628
        %v630 = vrot.slane %v629, 1
        %v631 = vadd.f32 %v629, %v630
        %v632 = vrot.slane %v619, 4
        %v633 = vadd.f32 %v619, %v632
        %v634 = vrot.slane %v633, 2
        %v635 = vadd.f32 %v633, %v634
        %v636 = vrot.slane %v635, 1
        %v637 = vadd.f32 %v635, %v636
        %v638 = vrot.slane %v620, 4
        %v639 = vadd.f32 %v620, %v638
        %v640 = vrot.slane %v639, 2
        %v641 = vadd.f32 %v639, %v640
        %v642 = vrot.slane %v641, 1
        %v643 = vadd.f32 %v641, %v642
        %v644 = vrot.slane %v621, 4
        %v645 = vadd.f32 %v621, %v644
        %v646 = vrot.slane %v645, 2
        %v647 = vadd.f32 %v645, %v646
        %v648 = vrot.slane %v647, 1
        %v649 = vadd.f32 %v647, %v648
        %v650 = vrot.slane %v622, 4
        %v651 = vadd.f32 %v622, %v650
        %v652 = vrot.slane %v651, 2
        %v653 = vadd.f32 %v651, %v652
        %v654 = vrot.slane %v653, 1
        %v655 = vadd.f32 %v653, %v654
        %v656 = vrot.slane %v623, 4
        %v657 = vadd.f32 %v623, %v656
        %v658 = vrot.slane %v657, 2
        %v659 = vadd.f32 %v657, %v658
        %v660 = vrot.slane %v659, 1
        %v661 = vadd.f32 %v659, %v660
        %v662 = vrot.slane %v624, 4
        %v663 = vadd.f32 %v624, %v662
        %v664 = vrot.slane %v663, 2
        %v665 = vadd.f32 %v663, %v664
        %v666 = vrot.slane %v665, 1
        %v667 = vadd.f32 %v665, %v666
        %v668 = vrot.slane %v625, 4
        %v669 = vadd.f32 %v625, %v668
        %v670 = vrot.slane %v669, 2
        %v671 = vadd.f32 %v669, %v670
        %v672 = vrot.slane %v671, 1
        %v673 = vadd.f32 %v671, %v672
        %v674 = vadd.f32 %v631, 0.0
        %v675 = vadd.f32 %v637, 0.0
        %v676 = vadd.f32 %v643, 0.0
        %v677 = vadd.f32 %v649, 0.0
        %v678 = vadd.f32 %v655, 0.0
        %v679 = vadd.f32 %v661, 0.0
        %v680 = vadd.f32 %v667, 0.0
        %v681 = vadd.f32 %v673, 0.0
        %s682 = scalar_lea.vmem [#allocation9], 8
        %v683 = vld [vmem:[%s682] sm:$0xff]
        %v684 = vsub.f32 %v683, %v402
        %v685 = vsub.f32 %v683, %v403
        %v686 = vsub.f32 %v683, %v404
        %v687 = vsub.f32 %v683, %v405
        %v688 = vsub.f32 %v683, %v406
        %v689 = vsub.f32 %v683, %v407
        %v690 = vsub.f32 %v683, %v408
        %v691 = vsub.f32 %v683, %v409
        %v692 = vand.u32 2147483647, %v684
        %v693 = vand.u32 2147483647, %v685
        %v694 = vand.u32 2147483647, %v686
        %v695 = vand.u32 2147483647, %v687
        %v696 = vand.u32 2147483647, %v688
        %v697 = vand.u32 2147483647, %v689
        %v698 = vand.u32 2147483647, %v690
        %v699 = vand.u32 2147483647, %v691
        %v700 = vmul.f32 %v692, %v434
        %v701 = vmul.f32 %v693, %v435
        %v702 = vmul.f32 %v694, %v436
        %v703 = vmul.f32 %v695, %v437
        %v704 = vmul.f32 %v696, %v438
        %v705 = vmul.f32 %v697, %v439
        %v706 = vmul.f32 %v698, %v440
        %v707 = vmul.f32 %v699, %v441
        %v708 = vmul.f32 %v700, 0.3275911
        %v709 = vmul.f32 %v701, 0.3275911
        %v710 = vmul.f32 %v702, 0.3275911
        %v711 = vmul.f32 %v703, 0.3275911
        %v712 = vmul.f32 %v704, 0.3275911
        %v713 = vmul.f32 %v705, 0.3275911
        %v714 = vmul.f32 %v706, 0.3275911
        %v715 = vmul.f32 %v707, 0.3275911
        %v716 = vadd.f32 %v708, 1.0
        %v717 = vadd.f32 %v709, 1.0
        %v718 = vadd.f32 %v710, 1.0
        %v719 = vadd.f32 %v711, 1.0
        %v720 = vadd.f32 %v712, 1.0
        %v721 = vadd.f32 %v713, 1.0
        %v722 = vadd.f32 %v714, 1.0
        %v723 = vadd.f32 %v715, 1.0
        %v724 = vrcp.pop %v716
        %v725 = vrcp.pop %v717
        %v726 = vrcp.pop %v718
        %v727 = vrcp.pop %v719
        %v728 = vrcp.pop %v720
        %v729 = vrcp.pop %v721
        %v730 = vrcp.pop %v722
        %v731 = vrcp.pop %v723
        %v732 = vmul.f32 %v716, %v724
        %v733 = vmul.f32 %v717, %v725
        %v734 = vmul.f32 %v718, %v726
        %v735 = vmul.f32 %v719, %v727
        %v736 = vmul.f32 %v720, %v728
        %v737 = vmul.f32 %v721, %v729
        %v738 = vmul.f32 %v722, %v730
        %v739 = vmul.f32 %v723, %v731
        %v740 = vsub.f32 2.0, %v732
        %v741 = vsub.f32 2.0, %v733
        %v742 = vsub.f32 2.0, %v734
        %v743 = vsub.f32 2.0, %v735
        %v744 = vsub.f32 2.0, %v736
        %v745 = vsub.f32 2.0, %v737
        %v746 = vsub.f32 2.0, %v738
        %v747 = vsub.f32 2.0, %v739
        %v748 = vmul.f32 %v724, %v740
        %v749 = vmul.f32 %v725, %v741
        %v750 = vmul.f32 %v726, %v742
        %v751 = vmul.f32 %v727, %v743
        %v752 = vmul.f32 %v728, %v744
        %v753 = vmul.f32 %v729, %v745
        %v754 = vmul.f32 %v730, %v746
        %v755 = vmul.f32 %v731, %v747
        %v756 = vmul.f32 %v748, 1.0614054
        %v757 = vmul.f32 %v749, 1.0614054
        %v758 = vmul.f32 %v750, 1.0614054
        %v759 = vmul.f32 %v751, 1.0614054
        %v760 = vmul.f32 %v752, 1.0614054
        %v761 = vmul.f32 %v753, 1.0614054
        %v762 = vmul.f32 %v754, 1.0614054
        %v763 = vmul.f32 %v755, 1.0614054
        %v764 = vadd.f32 %v756, -1.4531521
        %v765 = vadd.f32 %v757, -1.4531521
        %v766 = vadd.f32 %v758, -1.4531521
        %v767 = vadd.f32 %v759, -1.4531521
        %v768 = vadd.f32 %v760, -1.4531521
        %v769 = vadd.f32 %v761, -1.4531521
        %v770 = vadd.f32 %v762, -1.4531521
        %v771 = vadd.f32 %v763, -1.4531521
        %v772 = vmul.f32 %v764, %v748
        %v773 = vmul.f32 %v765, %v749
        %v774 = vmul.f32 %v766, %v750
        %v775 = vmul.f32 %v767, %v751
        %v776 = vmul.f32 %v768, %v752
        %v777 = vmul.f32 %v769, %v753
        %v778 = vmul.f32 %v770, %v754
        %v779 = vmul.f32 %v771, %v755
        %v780 = vadd.f32 %v772, 1.4214138
        %v781 = vadd.f32 %v773, 1.4214138
        %v782 = vadd.f32 %v774, 1.4214138
        %v783 = vadd.f32 %v775, 1.4214138
        %v784 = vadd.f32 %v776, 1.4214138
        %v785 = vadd.f32 %v777, 1.4214138
        %v786 = vadd.f32 %v778, 1.4214138
        %v787 = vadd.f32 %v779, 1.4214138
        %v788 = vmul.f32 %v780, %v748
        %v789 = vmul.f32 %v781, %v749
        %v790 = vmul.f32 %v782, %v750
        %v791 = vmul.f32 %v783, %v751
        %v792 = vmul.f32 %v784, %v752
        %v793 = vmul.f32 %v785, %v753
        %v794 = vmul.f32 %v786, %v754
        %v795 = vmul.f32 %v787, %v755
        %v796 = vadd.f32 %v788, -0.28449672
        %v797 = vadd.f32 %v789, -0.28449672
        %v798 = vadd.f32 %v790, -0.28449672
        %v799 = vadd.f32 %v791, -0.28449672
        %v800 = vadd.f32 %v792, -0.28449672
        %v801 = vadd.f32 %v793, -0.28449672
        %v802 = vadd.f32 %v794, -0.28449672
        %v803 = vadd.f32 %v795, -0.28449672
        %v804 = vmul.f32 %v796, %v748
        %v805 = vmul.f32 %v797, %v749
        %v806 = vmul.f32 %v798, %v750
        %v807 = vmul.f32 %v799, %v751
        %v808 = vmul.f32 %v800, %v752
        %v809 = vmul.f32 %v801, %v753
        %v810 = vmul.f32 %v802, %v754
        %v811 = vmul.f32 %v803, %v755
        %v812 = vadd.f32 %v804, 0.2548296
        %v813 = vadd.f32 %v805, 0.2548296
        %v814 = vadd.f32 %v806, 0.2548296
        %v815 = vadd.f32 %v807, 0.2548296
        %v816 = vadd.f32 %v808, 0.2548296
        %v817 = vadd.f32 %v809, 0.2548296
        %v818 = vadd.f32 %v810, 0.2548296
        %v819 = vadd.f32 %v811, 0.2548296
        %v820 = vmul.f32 %v812, %v748
        %v821 = vmul.f32 %v813, %v749
        %v822 = vmul.f32 %v814, %v750
        %v823 = vmul.f32 %v815, %v751
        %v824 = vmul.f32 %v816, %v752
        %v825 = vmul.f32 %v817, %v753
        %v826 = vmul.f32 %v818, %v754
        %v827 = vmul.f32 %v819, %v755
        %v828 = vsub.f32 0.0, %v700
        %v829 = vsub.f32 0.0, %v701
        %v830 = vsub.f32 0.0, %v702
        %v831 = vsub.f32 0.0, %v703
        %v832 = vsub.f32 0.0, %v704
        %v833 = vsub.f32 0.0, %v705
        %v834 = vsub.f32 0.0, %v706
        %v835 = vsub.f32 0.0, %v707
        %v836 = vmul.f32 %v828, %v700
        %v837 = vmul.f32 %v829, %v701
        %v838 = vmul.f32 %v830, %v702
        %v839 = vmul.f32 %v831, %v703
        %v840 = vmul.f32 %v832, %v704
        %v841 = vmul.f32 %v833, %v705
        %v842 = vmul.f32 %v834, %v706
        %v843 = vmul.f32 %v835, %v707
        %v844 = vmul.f32 %v836, 1.442695
        %v845 = vpow.pop %v844
        %v846 = vmul.f32 %v837, 1.442695
        %v847 = vpow.pop %v846
        %v848 = vmul.f32 %v838, 1.442695
        %v849 = vpow.pop %v848
        %v850 = vmul.f32 %v839, 1.442695
        %v851 = vpow.pop %v850
        %v852 = vmul.f32 %v840, 1.442695
        %v853 = vpow.pop %v852
        %v854 = vmul.f32 %v841, 1.442695
        %v855 = vpow.pop %v854
        %v856 = vmul.f32 %v842, 1.442695
        %v857 = vpow.pop %v856
        %v858 = vmul.f32 %v843, 1.442695
        %v859 = vpow.pop %v858
        %v860 = vmul.f32 %v820, %v845
        %v861 = vmul.f32 %v821, %v847
        %v862 = vmul.f32 %v822, %v849
        %v863 = vmul.f32 %v823, %v851
        %v864 = vmul.f32 %v824, %v853
        %v865 = vmul.f32 %v825, %v855
        %v866 = vmul.f32 %v826, %v857
        %v867 = vmul.f32 %v827, %v859
        %v868 = vsub.f32 1.0, %v860
        %v869 = vsub.f32 1.0, %v861
        %v870 = vsub.f32 1.0, %v862
        %v871 = vsub.f32 1.0, %v863
        %v872 = vsub.f32 1.0, %v864
        %v873 = vsub.f32 1.0, %v865
        %v874 = vsub.f32 1.0, %v866
        %v875 = vsub.f32 1.0, %v867
        %v876 = vrot.slane %v868, 4
        %v877 = vadd.f32 %v868, %v876
        %v878 = vrot.slane %v877, 2
        %v879 = vadd.f32 %v877, %v878
        %v880 = vrot.slane %v879, 1
        %v881 = vadd.f32 %v879, %v880
        %v882 = vrot.slane %v869, 4
        %v883 = vadd.f32 %v869, %v882
        %v884 = vrot.slane %v883, 2
        %v885 = vadd.f32 %v883, %v884
        %v886 = vrot.slane %v885, 1
        %v887 = vadd.f32 %v885, %v886
        %v888 = vrot.slane %v870, 4
        %v889 = vadd.f32 %v870, %v888
        %v890 = vrot.slane %v889, 2
        %v891 = vadd.f32 %v889, %v890
        %v892 = vrot.slane %v891, 1
        %v893 = vadd.f32 %v891, %v892
        %v894 = vrot.slane %v871, 4
        %v895 = vadd.f32 %v871, %v894
        %v896 = vrot.slane %v895, 2
        %v897 = vadd.f32 %v895, %v896
        %v898 = vrot.slane %v897, 1
        %v899 = vadd.f32 %v897, %v898
        %v900 = vrot.slane %v872, 4
        %v901 = vadd.f32 %v872, %v900
        %v902 = vrot.slane %v901, 2
        %v903 = vadd.f32 %v901, %v902
        %v904 = vrot.slane %v903, 1
        %v905 = vadd.f32 %v903, %v904
        %v906 = vrot.slane %v873, 4
        %v907 = vadd.f32 %v873, %v906
        %v908 = vrot.slane %v907, 2
        %v909 = vadd.f32 %v907, %v908
        %v910 = vrot.slane %v909, 1
        %v911 = vadd.f32 %v909, %v910
        %v912 = vrot.slane %v874, 4
        %v913 = vadd.f32 %v874, %v912
        %v914 = vrot.slane %v913, 2
        %v915 = vadd.f32 %v913, %v914
        %v916 = vrot.slane %v915, 1
        %v917 = vadd.f32 %v915, %v916
        %v918 = vrot.slane %v875, 4
        %v919 = vadd.f32 %v875, %v918
        %v920 = vrot.slane %v919, 2
        %v921 = vadd.f32 %v919, %v920
        %v922 = vrot.slane %v921, 1
        %v923 = vadd.f32 %v921, %v922
        %v924 = vadd.f32 %v674, %v881
        %v925 = vadd.f32 %v675, %v887
        %v926 = vadd.f32 %v676, %v893
        %v927 = vadd.f32 %v677, %v899
        %v928 = vadd.f32 %v678, %v905
        %v929 = vadd.f32 %v679, %v911
        %v930 = vadd.f32 %v680, %v917
        %v931 = vadd.f32 %v681, %v923
        %vm940 = vcmask 1041409
        %v941 = vsel %vm940, %v925, %v924
        %vm942 = vcmask 1042434
        %v943 = vsel %vm942, %v926, %v941
        %vm944 = vcmask 1043459
        %v945 = vsel %vm944, %v927, %v943
        %vm946 = vcmask 1044484
        %v947 = vsel %vm946, %v928, %v945
        %vm948 = vcmask 1045509
        %v949 = vsel %vm948, %v929, %v947
        %vm950 = vcmask 1046534
        %v951 = vsel %vm950, %v930, %v949
        %vm952 = vcmask 1047559
        %v953 = vsel %vm952, %v931, %v951
        %v955 = vsub.f32 %v384, %v953
        %956 = vst [vmem:[%s251] sm:$0xff] %v955
        %s957 = sand.u32 %s113, 1
        %s958 = scalar_lea.sflag [#allocation6], %s957
        %s959 = sand.u32 %s113, 1
        %s960 = smul.addr %s959, 8
        %s961 = scalar_lea.vmem [#allocation10], %s960
        // Predicated region
        $region45: #{tpu_custom_call.1} parent=31 // pred_check
          %p962 = pneg %p123
        $region46: #{tpu_custom_call.1} parent=31 // pred_check_branch
          %964 = sbr.rel (%p962) target = $region48
        $region47: #{tpu_custom_call.1} parent=31 // pred_region
          %966 = vsyncadd %s958, 0
          %s967 = smul.addr %s32, 8
          %s968 = scalar_lea.hbm %s4, %s967
          %s970 = sshll.u32 %s961, 4
          %s971 = int_to_ptr.vmem [resolvable:$true] %s970
          %s972 = sshll.u32 %s968, 4
          %s973 = int_to_ptr.hbm [resolvable:$true] %s972
          %975 = dma.vmem_to_hbm [thread:$0]  %s971, 128, %s973, %s958
        $region48: #{tpu_custom_call.1} parent=31 // pred_fallthru
          _
      $region32: #{tpu_custom_call.1} parent=5 // pred_fallthru
        _
      %p976 = scmp.le.s32.totalorder 2, %s27
      // Predicated region
      $region49: #{tpu_custom_call.1} parent=5 // pred_check
        %p977 = pneg %p976
      $region50: #{tpu_custom_call.1} parent=5 // pred_check_branch
        %979 = sbr.rel (%p977) target = $region52
      $region51: #{tpu_custom_call.1} parent=5 // pred_region
        %s980 = ssub.s32 %s27, 2
        // Predicated region
        $region53: #{tpu_custom_call.1} parent=51 // pred_check
          %p981 = pneg %p129
        $region54: #{tpu_custom_call.1} parent=51 // pred_check_branch
          %983 = sbr.rel (%p981) target = $region56
        $region55: #{tpu_custom_call.1} parent=51 // pred_region
          %s984 = sand.u32 %s114, 1
          %s985 = scalar_lea.sflag [#allocation6], %s984
          %s986 = sand.u32 %s114, 1
          %s987 = smul.addr %s986, 8
          %s988 = scalar_lea.vmem [#allocation10], %s987
          %990 = dma.done %s985, 128
        $region56: #{tpu_custom_call.1} parent=51 // pred_fallthru
          _
      $region52: #{tpu_custom_call.1} parent=5 // pred_fallthru
        _
    $region6: #{tpu_custom_call.1} parent=1 // loop_footer
      %s31 = sadd.s32 1, %s27
    $region7: #{tpu_custom_call.1} parent=1 // loop_footer_branch
      %26 = sbr.rel target = $region3
    $region8: #{tpu_custom_call.1} parent=1 // loop_exit
      _
    %991 = vsyncpa [#allocation5], 1
    %s992 = scalar_lea.sflag [#allocation5], 1
    %993 = vsyncpa %s992, 1
    %994 = vsyncpa [#allocation8], 1
    %s995 = scalar_lea.sflag [#allocation8], 1
    %996 = vsyncpa %s995, 1
    %997 = vsyncpa [#allocation6], 1
    %s998 = scalar_lea.sflag [#allocation6], 1
    %999 = vsyncpa %s998, 1

// kernel: tpu_custom_call.1
$region0: #{tpu_custom_call.1}
  #allocation0 [shape = 'u32[]', space=smem, size = 0x4, offset = 0x4, fixed_abs, tag = 'smem constant byte address 0x4 - core index']
  #allocation1 [shape = 'u32[72,128]{1,0:T(1,128)}', space=vmem, size = 0x9000, scoped, tag = 'internal scratch']
  #allocation2 [shape = 's32[1]{0}', space=sflag, size = 0x4, scoped, tag = 'scoped memory for tpu_custom_call.1']
  #allocation3 [shape = 'u8[512]{0}', space=smem, size = 0x200, scoped, tag = 'prefetched SMEM operand 0']
  %s0 = inlined_call_operand.hbm [shape: s32[16], index: 0, kind: input, shape index: {}]
  %s1 = inlined_call_operand.hbm [shape: f32[16,128], index: 1, kind: input, shape index: {}]
  %s2 = inlined_call_operand.hbm [shape: f32[16,128], index: 2, kind: input, shape index: {}]
  %s3 = inlined_call_operand.hbm [shape: f32[16,128], index: 3, kind: input, shape index: {}]
  %s4 = inlined_call_operand.hbm [shape: f32[16,128], index: 4, kind: output, shape index: {}]
  %s5 = sld [smem:[#allocation0]]
  $region57: #{tpu_custom_call.1} parent=0
    _
  %s7 = ssub.s32 1, %s5
  %s8 = scalar_select 0, %s7, %s5
  %s10 = sshll.u32 %s0, 4
  %s11 = int_to_ptr.hbm [resolvable:$true] %s10
  %13 = dma.hbm_to_smem %s11, 16, [#allocation3], [#allocation2]
  %15 = dma.done [#allocation2], 16
  %16 = sfence
  $region1: #{tpu_custom_call.1} parent=0
    #allocation4 [shape = 'u8[8192]{0}', space=vmem, size = 0x2000, scoped, tag = 'input window, operand 1']
    #allocation5 [shape = 's32[2]{0}', space=sflag, size = 0x8, scoped, tag = 'scoped memory for tpu_custom_call.1']
    #allocation6 [shape = 's32[2]{0}', space=sflag, size = 0x8, scoped, tag = 'scoped memory for tpu_custom_call.1']
    #allocation7 [shape = 'u8[8192]{0}', space=vmem, size = 0x2000, scoped, tag = 'input window, operand 2']
    #allocation8 [shape = 's32[2]{0}', space=sflag, size = 0x8, scoped, tag = 'scoped memory for tpu_custom_call.1']
    #allocation9 [shape = 'u8[8192]{0}', space=vmem, size = 0x2000, scoped, tag = 'input window, operand 3, single buffered']
    #allocation10 [shape = 'u8[8192]{0}', space=vmem, size = 0x2000, scoped, tag = 'output window, operand 0']
    %17 = vsyncpa [#allocation5], 0
    %s18 = scalar_lea.sflag [#allocation5], 1
    %19 = vsyncpa %s18, 0
    %20 = vsyncpa [#allocation8], 0
    %s21 = scalar_lea.sflag [#allocation8], 1
    %22 = vsyncpa %s21, 0
    %23 = vsyncpa [#allocation6], 0
    %s24 = scalar_lea.sflag [#allocation6], 1
    %25 = vsyncpa %s24, 0
    loop: start=0, step=1, limit=4
    $region2: #{tpu_custom_call.1} parent=1 // loop_pre_header
      _
    $region3: #{tpu_custom_call.1} parent=1 // loop_header
      %s27 = sphi 0, %s31
      %p28 = scmp.ge.s32.totalorder %s27, 4
      %s37 = sphi 0, %s39
      %s40 = sphi 0, %s37
      %s41 = sphi 0, %s40
      %s57 = sphi 0, %s41
      %s63 = sphi 0, %s65
      %s66 = sphi 0, %s63
      %s67 = sphi 0, %s66
      %s83 = sphi 0, %s67
      %s87 = sphi 0, %s87
      %s89 = sphi 0, %s87
      %s90 = sphi 0, %s89
      %s104 = sphi 0, %s90
      %s110 = sphi 0, %s112
      %s113 = sphi 0, %s110
      %s114 = sphi 0, %s113
      %s130 = sphi 0, %s114
    $region4: #{tpu_custom_call.1} parent=1 // loop_header_branch
      %30 = sbr.rel (%p28) target = $region8
    $region5: #{tpu_custom_call.1} parent=1 // loop_body
      %s32 = ssub.s32 %s27, 1
      %s33 = ssub.s32 %s27, 2
      %s34 = sadd.s32 %s27, 1
      %s35 = ssub.s32 %s27, %s34
      %p36 = scmp.eq.s32.totalorder %s35, 0
      %s38 = sadd.s32 %s37, 1
      %s39 = scalar_select %p36, %s37, %s38
      %p42 = pneg %p36
      %p43 = scmp.eq.s32.totalorder %s27, 1
      %p44 = por %p42, %p43
      %p45 = scmp.ne.s32.totalorder %s37, %s40
      %p46 = scmp.eq.s32.totalorder %s27, 0
      %p47 = por %p45, %p46
      %p48 = scmp.ne.s32.totalorder %s37, %s40
      %p49 = scmp.eq.s32.totalorder %s32, 1
      %p50 = por %p48, %p49
      %p51 = scmp.ne.s32.totalorder %s40, %s41
      %p52 = scmp.eq.s32.totalorder %s32, 0
      %p53 = por %p51, %p52
      %p54 = scmp.ne.s32.totalorder %s40, %s41
      %p55 = scmp.eq.s32.totalorder %s33, 1
      %p56 = por %p54, %p55
      %p58 = scmp.ne.s32.totalorder %s41, %s57
      %p59 = scmp.eq.s32.totalorder %s33, 0
      %p60 = por %p58, %p59
      %s61 = ssub.s32 %s27, %s34
      %p62 = scmp.eq.s32.totalorder %s61, 0
      %s64 = sadd.s32 %s63, 1
      %s65 = scalar_select %p62, %s63, %s64
      %p68 = pneg %p62
      %p69 = scmp.eq.s32.totalorder %s27, 1
      %p70 = por %p68, %p69
      %p71 = scmp.ne.s32.totalorder %s63, %s66
      %p72 = scmp.eq.s32.totalorder %s27, 0
      %p73 = por %p71, %p72
      %p74 = scmp.ne.s32.totalorder %s63, %s66
      %p75 = scmp.eq.s32.totalorder %s32, 1
      %p76 = por %p74, %p75
      %p77 = scmp.ne.s32.totalorder %s66, %s67
      %p78 = scmp.eq.s32.totalorder %s32, 0
      %p79 = por %p77, %p78
      %p80 = scmp.ne.s32.totalorder %s66, %s67
      %p81 = scmp.eq.s32.totalorder %s33, 1
      %p82 = por %p80, %p81
      %p84 = scmp.ne.s32.totalorder %s67, %s83
      %p85 = scmp.eq.s32.totalorder %s33, 0
      %p86 = por %p84, %p85
      %s88 = sadd.s32 %s87, 1
      %p91 = scmp.eq.s32.totalorder %s27, 1
      %p92 = scmp.ne.s32.totalorder %s87, %s89
      %p93 = scmp.eq.s32.totalorder %s27, 0
      %p94 = por %p92, %p93
      %p95 = scmp.ne.s32.totalorder %s87, %s89
      %p96 = scmp.eq.s32.totalorder %s32, 1
      %p97 = por %p95, %p96
      %p98 = scmp.ne.s32.totalorder %s89, %s90
      %p99 = scmp.eq.s32.totalorder %s32, 0
      %p100 = por %p98, %p99
      %p101 = scmp.ne.s32.totalorder %s89, %s90
      %p102 = scmp.eq.s32.totalorder %s33, 1
      %p103 = por %p101, %p102
      %p105 = scmp.ne.s32.totalorder %s90, %s104
      %p106 = scmp.eq.s32.totalorder %s33, 0
      %p107 = por %p105, %p106
      %s108 = ssub.s32 %s27, %s34
      %p109 = scmp.eq.s32.totalorder %s108, 0
      %s111 = sadd.s32 %s110, 1
      %s112 = scalar_select %p109, %s110, %s111
      %p115 = pneg %p109
      %p116 = scmp.eq.s32.totalorder %s27, 1
      %p117 = por %p115, %p116
      %p118 = scmp.ne.s32.totalorder %s110, %s113
      %p119 = scmp.eq.s32.totalorder %s27, 0
      %p120 = por %p118, %p119
      %p121 = scmp.ne.s32.totalorder %s110, %s113
      %p122 = scmp.eq.s32.totalorder %s32, 1
      %p123 = por %p121, %p122
      %p124 = scmp.ne.s32.totalorder %s113, %s114
      %p125 = scmp.eq.s32.totalorder %s32, 0
      %p126 = por %p124, %p125
      %p127 = scmp.ne.s32.totalorder %s113, %s114
      %p128 = scmp.eq.s32.totalorder %s33, 1
      %p129 = por %p127, %p128
      %p131 = scmp.ne.s32.totalorder %s114, %s130
      %p132 = scmp.eq.s32.totalorder %s33, 0
      %p133 = por %p131, %p132
      %p134 = scmp.le.s32.totalorder 1, %s27
      %p135 = scmp.lt.s32.totalorder %s27, 3
      %p136 = pnand %p134, %p135
      %p137 = pneg %p136
      // Predicated region
      $region9: #{tpu_custom_call.1} parent=5 // pred_check
        _
      $region10: #{tpu_custom_call.1} parent=5 // pred_check_branch
        %139 = sbr.rel (%p136) target = $region12
      $region11: #{tpu_custom_call.1} parent=5 // pred_region
        %s140 = ssub.s32 %s27, 1
        // Predicated region
        $region13: #{tpu_custom_call.1} parent=11 // pred_check
          %p141 = pneg %p100
        $region14: #{tpu_custom_call.1} parent=11 // pred_check_branch
          %143 = sbr.rel (%p141) target = $region16
        $region15: #{tpu_custom_call.1} parent=11 // pred_region
          %145 = vsyncadd [#allocation8], 0
          %s146 = sshll.u32 %s3, 4
          %s147 = int_to_ptr.hbm [resolvable:$true] %s146
          %s148 = sshll.u32 [#allocation9], 4
          %s149 = int_to_ptr.vmem [resolvable:$true] %s148
          %154 = dma.hbm_to_vmem [thread:$0]  %s147, 256, %s149, [#allocation8], 128, 128, 8
        $region16: #{tpu_custom_call.1} parent=11 // pred_fallthru
          _
      $region12: #{tpu_custom_call.1} parent=5 // pred_fallthru
        _
      %p155 = scmp.lt.s32.totalorder %s27, 2
      // Predicated region
      $region17: #{tpu_custom_call.1} parent=5 // pred_check
        %p156 = pneg %p155
      $region18: #{tpu_custom_call.1} parent=5 // pred_check_branch
        %158 = sbr.rel (%p156) target = $region20
      $region19: #{tpu_custom_call.1} parent=5 // pred_region
        // Predicated region
        $region21: #{tpu_custom_call.1} parent=19 // pred_check
          %p159 = pneg %p47
        $region22: #{tpu_custom_call.1} parent=19 // pred_check_branch
          %161 = sbr.rel (%p159) target = $region24
        $region23: #{tpu_custom_call.1} parent=19 // pred_region
          %s162 = sand.u32 %s37, 1
          %s163 = scalar_lea.sflag [#allocation5], %s162
          %s164 = sand.u32 %s37, 1
          %s165 = smul.addr %s164, 8
          %s166 = scalar_lea.vmem [#allocation4], %s165
          %168 = vsyncadd %s163, 0
          %s169 = smul.addr %s27, 8
          %s170 = scalar_lea.hbm %s1, %s169
          %s172 = sshll.u32 %s170, 4
          %s173 = int_to_ptr.hbm [resolvable:$true] %s172
          %s174 = sshll.u32 %s166, 4
          %s175 = int_to_ptr.vmem [resolvable:$true] %s174
          %177 = dma.hbm_to_vmem [thread:$0]  %s173, 128, %s175, %s163
        $region24: #{tpu_custom_call.1} parent=19 // pred_fallthru
          _
        // Predicated region
        $region25: #{tpu_custom_call.1} parent=19 // pred_check
          %p178 = pneg %p73
        $region26: #{tpu_custom_call.1} parent=19 // pred_check_branch
          %180 = sbr.rel (%p178) target = $region28
        $region27: #{tpu_custom_call.1} parent=19 // pred_region
          %s181 = sand.u32 %s27, 1
          %s182 = scalar_lea.sflag [#allocation8], %s181
          %s183 = sand.u32 %s63, 1
          %s184 = smul.addr %s183, 8
          %s185 = scalar_lea.vmem [#allocation7], %s184
          %187 = vsyncadd %s182, 0
          %s188 = smul.addr %s27, 8
          %s189 = scalar_lea.hbm %s2, %s188
          %s191 = sshll.u32 %s189, 4
          %s192 = int_to_ptr.hbm [resolvable:$true] %s191
          %s193 = sshll.u32 %s185, 4
          %s194 = int_to_ptr.vmem [resolvable:$true] %s193
          %196 = dma.hbm_to_vmem [thread:$0]  %s192, 128, %s194, %s182
        $region28: #{tpu_custom_call.1} parent=19 // pred_fallthru
          _
      $region20: #{tpu_custom_call.1} parent=5 // pred_fallthru
        _
      %p197 = scmp.le.s32.totalorder 1, %s27
      %p198 = scmp.lt.s32.totalorder %s27, 3
      %p199 = pnand %p197, %p198
      %p200 = pneg %p199
      // Predicated region
      $region29: #{tpu_custom_call.1} parent=5 // pred_check
        _
      $region30: #{tpu_custom_call.1} parent=5 // pred_check_branch
        %202 = sbr.rel (%p199) target = $region32
      $region31: #{tpu_custom_call.1} parent=5 // pred_region
        %s203 = ssub.s32 %s27, 1
        %s204 = sand.u32 %s40, 1
        %s205 = scalar_lea.sflag [#allocation5], %s204
        %s206 = sand.u32 %s40, 1
        %s207 = smul.addr %s206, 8
        %s208 = scalar_lea.vmem [#allocation4], %s207
        // Predicated region
        $region33: #{tpu_custom_call.1} parent=31 // pred_check
          %p209 = pneg %p53
        $region34: #{tpu_custom_call.1} parent=31 // pred_check_branch
          %211 = sbr.rel (%p209) target = $region36
        $region35: #{tpu_custom_call.1} parent=31 // pred_region
          %213 = dma.done %s205, 128
        $region36: #{tpu_custom_call.1} parent=31 // pred_fallthru
          _
        %s214 = sand.u32 %s32, 1
        %s215 = scalar_lea.sflag [#allocation8], %s214
        %s216 = sand.u32 %s66, 1
        %s217 = smul.addr %s216, 8
        %s218 = scalar_lea.vmem [#allocation7], %s217
        // Predicated region
        $region37: #{tpu_custom_call.1} parent=31 // pred_check
          %p219 = pneg %p79
        $region38: #{tpu_custom_call.1} parent=31 // pred_check_branch
          %221 = sbr.rel (%p219) target = $region40
        $region39: #{tpu_custom_call.1} parent=31 // pred_region
          %223 = dma.done %s215, 128
        $region40: #{tpu_custom_call.1} parent=31 // pred_fallthru
          _
        // Predicated region
        $region41: #{tpu_custom_call.1} parent=31 // pred_check
          %p224 = pneg %p100
        $region42: #{tpu_custom_call.1} parent=31 // pred_check_branch
          %226 = sbr.rel (%p224) target = $region44
        $region43: #{tpu_custom_call.1} parent=31 // pred_region
          %228 = dma.done [#allocation8], 256
        $region44: #{tpu_custom_call.1} parent=31 // pred_fallthru
          _
        %s229 = sand.u32 %s40, 1
        %s230 = scalar_lea.sflag [#allocation5], %s229
        %s231 = sand.u32 %s40, 1
        %s232 = smul.addr %s231, 8
        %s233 = scalar_lea.vmem [#allocation4], %s232
        %p234 = pneg %p53
        %p235 = pneg %p50
        %s236 = sand.u32 %s32, 1
        %s237 = scalar_lea.sflag [#allocation8], %s236
        %s238 = sand.u32 %s66, 1
        %s239 = smul.addr %s238, 8
        %s240 = scalar_lea.vmem [#allocation7], %s239
        %p241 = pneg %p79
        %p242 = pneg %p76
        %p243 = pneg %p100
        %p244 = pneg %p97
        %p245 = pneg %p126
        %p246 = pneg %p123
        %s247 = sand.u32 %s113, 1
        %s248 = scalar_lea.sflag [#allocation6], %s247
        %s249 = sand.u32 %s113, 1
        %s250 = smul.addr %s249, 8
        %s251 = scalar_lea.vmem [#allocation10], %s250
        %v252 = vld [vmem:[%s208] sm:$0xff]
        %v253 = vld [vmem:[%s218] sm:$0xff]
        %v254 = vadd.f32 %v253, 1e-08
        %v255 = vrcp.pop %v254
        %v256 = vmul.f32 %v254, %v255
        %v257 = vsub.f32 1.0, %v256
        %v258 = vmul.f32 %v255, %v257
        %v259 = vadd.f32 %v255, %v258
        %vm260 = vweird.f32 %v254
        %vm261 = vweird.f32 %v255
        %vm262 = vmor %vm260, %vm261
        %v263 = vsel %vm262, %v255, %v259
        %v264 = vand.u32 2147483647, %v254
        %vm265 = vcmp.eq.f32.partialorder %v264, 8.507059e+37
        %v266 = vand.u32 %v254, 2147483648
        %v267 = vor.u32 1.1754944e-38, %v266
        %v268 = vsel %vm265, %v267, %v263
        %v269 = vmul.f32 0.70710677, %v268
        %v270 = vlaneseq
        %v271 = vand.u32 %v270, 127
        %s272 = smul.u32 %s32, 8
        %s273 = sld [smem:[#allocation3 + %s272]]
        %v274 = vstv %s273
        %vm275 = vcmp.eq.s32.totalorder %v271, %v274
        %v276 = vsel %vm275, 1, 0
        %v277 = vcvt.s32.f32 %v276
        %s278 = sadd.s32 %s272, 1
        %s279 = sld [smem:[#allocation3 + %s278]]
        %v280 = vstv %s279
        %vm281 = vcmp.eq.s32.totalorder %v271, %v280
        %v282 = vsel %vm281, 1, 0
        %v283 = vcvt.s32.f32 %v282
        %s284 = sadd.s32 %s272, 2
        %s285 = sld [smem:[#allocation3 + %s284]]
        %v286 = vstv %s285
        %vm287 = vcmp.eq.s32.totalorder %v271, %v286
        %v288 = vsel %vm287, 1, 0
        %v289 = vcvt.s32.f32 %v288
        %s290 = sadd.s32 %s272, 3
        %s291 = sld [smem:[#allocation3 + %s290]]
        %v292 = vstv %s291
        %vm293 = vcmp.eq.s32.totalorder %v271, %v292
        %v294 = vsel %vm293, 1, 0
        %v295 = vcvt.s32.f32 %v294
        %s296 = sadd.s32 %s272, 4
        %s297 = sld [smem:[#allocation3 + %s296]]
        %v298 = vstv %s297
        %vm299 = vcmp.eq.s32.totalorder %v271, %v298
        %v300 = vsel %vm299, 1, 0
        %v301 = vcvt.s32.f32 %v300
        %s302 = sadd.s32 %s272, 5
        %s303 = sld [smem:[#allocation3 + %s302]]
        %v304 = vstv %s303
        %vm305 = vcmp.eq.s32.totalorder %v271, %v304
        %v306 = vsel %vm305, 1, 0
        %v307 = vcvt.s32.f32 %v306
        %s308 = sadd.s32 %s272, 6
        %s309 = sld [smem:[#allocation3 + %s308]]
        %v310 = vstv %s309
        %vm311 = vcmp.eq.s32.totalorder %v271, %v310
        %v312 = vsel %vm311, 1, 0
        %v313 = vcvt.s32.f32 %v312
        %s314 = sadd.s32 %s272, 7
        %s315 = sld [smem:[#allocation3 + %s314]]
        %v316 = vstv %s315
        %vm317 = vcmp.eq.s32.totalorder %v271, %v316
        %v318 = vsel %vm317, 1, 0
        %v319 = vcvt.s32.f32 %v318
        %vm320 = vcmask 1040384
        %v321 = vsel %vm320, %v277, %v283
        %vm322 = vcmask 1041408
        %v323 = vsel %vm322, %v321, %v289
        %vm324 = vcmask 1042432
        %v325 = vsel %vm324, %v323, %v295
        %vm326 = vcmask 1043456
        %v327 = vsel %vm326, %v325, %v301
        %vm328 = vcmask 1044480
        %v329 = vsel %vm328, %v327, %v307
        %vm330 = vcmask 1045504
        %v331 = vsel %vm330, %v329, %v313
        %vm332 = vcmask 1046528
        %v333 = vsel %vm332, %v331, %v319
        %v334 = vld [vmem:[#allocation9] sm:$0xff]
        %v335 = vld [vmem:[#allocation9 + $0x8] sm:$0xff]
        %vm336 = vcmask 130048
        %v338 = vsel %vm336, %v333, 0
        %340 = vmatpush.msra.mxu0 0.0
        %341 = vmatpush.msra.mxu0 0.0
        %342 = vmatpush.msra.mxu0 0.0
        %343 = vmatpush.msra.mxu0 0.0
        %344 = vmatpush.msra.mxu0 0.0
        %345 = vmatpush.msra.mxu0 0.0
        %346 = vmatpush.msra.mxu0 0.0
        %347 = vmatpush.msra.mxu0 0.0
        %348 = vmatpush.msra.mxu0 0.0
        %349 = vmatpush.msra.mxu0 0.0
        %350 = vmatpush.msra.mxu0 0.0
        %351 = vmatpush.msra.mxu0 0.0
        %352 = vmatpush.msra.mxu0 0.0
        %353 = vmatpush.msra.mxu0 0.0
        %354 = vmatpush.msra.mxu0 %v335
        %355 = vmatpush.msra.mxu0 %v334
        %356 = vmatmul.f32.gmra.mxu0 %v338
        %v357 = vpop.f32.mrf.mxu0
        %v358 = vadd.f32 0.0, %v357
        %359 = vdwg.mxu0
        %v360 = vsub.f32 %v358, %v252
        %v361 = vand.u32 2147483647, %v360
        %v362 = vmul.f32 %v361, %v269
        %v363 = vmul.f32 %v362, 0.3275911
        %v364 = vadd.f32 %v363, 1.0
        %v365 = vrcp.pop %v364
        %v366 = vmul.f32 %v364, %v365
        %v367 = vsub.f32 2.0, %v366
        %v368 = vmul.f32 %v365, %v367
        %v369 = vmul.f32 %v368, 1.0614054
        %v370 = vadd.f32 %v369, -1.4531521
        %v371 = vmul.f32 %v370, %v368
        %v372 = vadd.f32 %v371, 1.4214138
        %v373 = vmul.f32 %v372, %v368
        %v374 = vadd.f32 %v373, -0.28449672
        %v375 = vmul.f32 %v374, %v368
        %v376 = vadd.f32 %v375, 0.2548296
        %v377 = vmul.f32 %v376, %v368
        %v378 = vsub.f32 0.0, %v362
        %v379 = vmul.f32 %v378, %v362
        %v380 = vmul.f32 %v379, 1.442695
        %v381 = vpow.pop %v380
        %v382 = vmul.f32 %v377, %v381
        %v383 = vsub.f32 1.0, %v382
        %v384 = vmul.f32 %v383, 2.0
        %v386 = vrot.slane %v252, 1
        %v387 = vrot.slane %v252, 2
        %v388 = vrot.slane %v252, 3
        %v389 = vrot.slane %v252, 4
        %v390 = vrot.slane %v252, 5
        %v391 = vrot.slane %v252, 6
        %v392 = vrot.slane %v252, 7
        %v394 = vrot.slane %v269, 1
        %v395 = vrot.slane %v269, 2
        %v396 = vrot.slane %v269, 3
        %v397 = vrot.slane %v269, 4
        %v398 = vrot.slane %v269, 5
        %v399 = vrot.slane %v269, 6
        %v400 = vrot.slane %v269, 7
        %v401 = vld [vmem:[#allocation9] sm:$0xff]
        %v402 = vperm.slane %v252, 0
        %v403 = vperm.slane %v386, 0
        %v404 = vperm.slane %v387, 0
        %v405 = vperm.slane %v388, 0
        %v406 = vperm.slane %v389, 0
        %v407 = vperm.slane %v390, 0
        %v408 = vperm.slane %v391, 0
        %v409 = vperm.slane %v392, 0
        %v418 = vsub.f32 %v401, %v402
        %v419 = vsub.f32 %v401, %v403
        %v420 = vsub.f32 %v401, %v404
        %v421 = vsub.f32 %v401, %v405
        %v422 = vsub.f32 %v401, %v406
        %v423 = vsub.f32 %v401, %v407
        %v424 = vsub.f32 %v401, %v408
        %v425 = vsub.f32 %v401, %v409
        %v426 = vand.u32 2147483647, %v418
        %v427 = vand.u32 2147483647, %v419
        %v428 = vand.u32 2147483647, %v420
        %v429 = vand.u32 2147483647, %v421
        %v430 = vand.u32 2147483647, %v422
        %v431 = vand.u32 2147483647, %v423
        %v432 = vand.u32 2147483647, %v424
        %v433 = vand.u32 2147483647, %v425
        %v434 = vperm.slane %v269, 0
        %v435 = vperm.slane %v394, 0
        %v436 = vperm.slane %v395, 0
        %v437 = vperm.slane %v396, 0
        %v438 = vperm.slane %v397, 0
        %v439 = vperm.slane %v398, 0
        %v440 = vperm.slane %v399, 0
        %v441 = vperm.slane %v400, 0
        %v450 = vmul.f32 %v426, %v434
        %v451 = vmul.f32 %v427, %v435
        %v452 = vmul.f32 %v428, %v436
        %v453 = vmul.f32 %v429, %v437
        %v454 = vmul.f32 %v430, %v438
        %v455 = vmul.f32 %v431, %v439
        %v456 = vmul.f32 %v432, %v440
        %v457 = vmul.f32 %v433, %v441
        %v458 = vmul.f32 %v450, 0.3275911
        %v459 = vmul.f32 %v451, 0.3275911
        %v460 = vmul.f32 %v452, 0.3275911
        %v461 = vmul.f32 %v453, 0.3275911
        %v462 = vmul.f32 %v454, 0.3275911
        %v463 = vmul.f32 %v455, 0.3275911
        %v464 = vmul.f32 %v456, 0.3275911
        %v465 = vmul.f32 %v457, 0.3275911
        %v466 = vadd.f32 %v458, 1.0
        %v467 = vadd.f32 %v459, 1.0
        %v468 = vadd.f32 %v460, 1.0
        %v469 = vadd.f32 %v461, 1.0
        %v470 = vadd.f32 %v462, 1.0
        %v471 = vadd.f32 %v463, 1.0
        %v472 = vadd.f32 %v464, 1.0
        %v473 = vadd.f32 %v465, 1.0
        %v474 = vrcp.pop %v466
        %v475 = vrcp.pop %v467
        %v476 = vrcp.pop %v468
        %v477 = vrcp.pop %v469
        %v478 = vrcp.pop %v470
        %v479 = vrcp.pop %v471
        %v480 = vrcp.pop %v472
        %v481 = vrcp.pop %v473
        %v482 = vmul.f32 %v466, %v474
        %v483 = vmul.f32 %v467, %v475
        %v484 = vmul.f32 %v468, %v476
        %v485 = vmul.f32 %v469, %v477
        %v486 = vmul.f32 %v470, %v478
        %v487 = vmul.f32 %v471, %v479
        %v488 = vmul.f32 %v472, %v480
        %v489 = vmul.f32 %v473, %v481
        %v490 = vsub.f32 2.0, %v482
        %v491 = vsub.f32 2.0, %v483
        %v492 = vsub.f32 2.0, %v484
        %v493 = vsub.f32 2.0, %v485
        %v494 = vsub.f32 2.0, %v486
        %v495 = vsub.f32 2.0, %v487
        %v496 = vsub.f32 2.0, %v488
        %v497 = vsub.f32 2.0, %v489
        %v498 = vmul.f32 %v474, %v490
        %v499 = vmul.f32 %v475, %v491
        %v500 = vmul.f32 %v476, %v492
        %v501 = vmul.f32 %v477, %v493
        %v502 = vmul.f32 %v478, %v494
        %v503 = vmul.f32 %v479, %v495
        %v504 = vmul.f32 %v480, %v496
        %v505 = vmul.f32 %v481, %v497
        %v506 = vmul.f32 %v498, 1.0614054
        %v507 = vmul.f32 %v499, 1.0614054
        %v508 = vmul.f32 %v500, 1.0614054
        %v509 = vmul.f32 %v501, 1.0614054
        %v510 = vmul.f32 %v502, 1.0614054
        %v511 = vmul.f32 %v503, 1.0614054
        %v512 = vmul.f32 %v504, 1.0614054
        %v513 = vmul.f32 %v505, 1.0614054
        %v514 = vadd.f32 %v506, -1.4531521
        %v515 = vadd.f32 %v507, -1.4531521
        %v516 = vadd.f32 %v508, -1.4531521
        %v517 = vadd.f32 %v509, -1.4531521
        %v518 = vadd.f32 %v510, -1.4531521
        %v519 = vadd.f32 %v511, -1.4531521
        %v520 = vadd.f32 %v512, -1.4531521
        %v521 = vadd.f32 %v513, -1.4531521
        %v522 = vmul.f32 %v514, %v498
        %v523 = vmul.f32 %v515, %v499
        %v524 = vmul.f32 %v516, %v500
        %v525 = vmul.f32 %v517, %v501
        %v526 = vmul.f32 %v518, %v502
        %v527 = vmul.f32 %v519, %v503
        %v528 = vmul.f32 %v520, %v504
        %v529 = vmul.f32 %v521, %v505
        %v530 = vadd.f32 %v522, 1.4214138
        %v531 = vadd.f32 %v523, 1.4214138
        %v532 = vadd.f32 %v524, 1.4214138
        %v533 = vadd.f32 %v525, 1.4214138
        %v534 = vadd.f32 %v526, 1.4214138
        %v535 = vadd.f32 %v527, 1.4214138
        %v536 = vadd.f32 %v528, 1.4214138
        %v537 = vadd.f32 %v529, 1.4214138
        %v538 = vmul.f32 %v530, %v498
        %v539 = vmul.f32 %v531, %v499
        %v540 = vmul.f32 %v532, %v500
        %v541 = vmul.f32 %v533, %v501
        %v542 = vmul.f32 %v534, %v502
        %v543 = vmul.f32 %v535, %v503
        %v544 = vmul.f32 %v536, %v504
        %v545 = vmul.f32 %v537, %v505
        %v546 = vadd.f32 %v538, -0.28449672
        %v547 = vadd.f32 %v539, -0.28449672
        %v548 = vadd.f32 %v540, -0.28449672
        %v549 = vadd.f32 %v541, -0.28449672
        %v550 = vadd.f32 %v542, -0.28449672
        %v551 = vadd.f32 %v543, -0.28449672
        %v552 = vadd.f32 %v544, -0.28449672
        %v553 = vadd.f32 %v545, -0.28449672
        %v554 = vmul.f32 %v546, %v498
        %v555 = vmul.f32 %v547, %v499
        %v556 = vmul.f32 %v548, %v500
        %v557 = vmul.f32 %v549, %v501
        %v558 = vmul.f32 %v550, %v502
        %v559 = vmul.f32 %v551, %v503
        %v560 = vmul.f32 %v552, %v504
        %v561 = vmul.f32 %v553, %v505
        %v562 = vadd.f32 %v554, 0.2548296
        %v563 = vadd.f32 %v555, 0.2548296
        %v564 = vadd.f32 %v556, 0.2548296
        %v565 = vadd.f32 %v557, 0.2548296
        %v566 = vadd.f32 %v558, 0.2548296
        %v567 = vadd.f32 %v559, 0.2548296
        %v568 = vadd.f32 %v560, 0.2548296
        %v569 = vadd.f32 %v561, 0.2548296
        %v570 = vmul.f32 %v562, %v498
        %v571 = vmul.f32 %v563, %v499
        %v572 = vmul.f32 %v564, %v500
        %v573 = vmul.f32 %v565, %v501
        %v574 = vmul.f32 %v566, %v502
        %v575 = vmul.f32 %v567, %v503
        %v576 = vmul.f32 %v568, %v504
        %v577 = vmul.f32 %v569, %v505
        %v578 = vsub.f32 0.0, %v450
        %v579 = vsub.f32 0.0, %v451
        %v580 = vsub.f32 0.0, %v452
        %v581 = vsub.f32 0.0, %v453
        %v582 = vsub.f32 0.0, %v454
        %v583 = vsub.f32 0.0, %v455
        %v584 = vsub.f32 0.0, %v456
        %v585 = vsub.f32 0.0, %v457
        %v586 = vmul.f32 %v578, %v450
        %v587 = vmul.f32 %v579, %v451
        %v588 = vmul.f32 %v580, %v452
        %v589 = vmul.f32 %v581, %v453
        %v590 = vmul.f32 %v582, %v454
        %v591 = vmul.f32 %v583, %v455
        %v592 = vmul.f32 %v584, %v456
        %v593 = vmul.f32 %v585, %v457
        %v594 = vmul.f32 %v586, 1.442695
        %v595 = vpow.pop %v594
        %v596 = vmul.f32 %v587, 1.442695
        %v597 = vpow.pop %v596
        %v598 = vmul.f32 %v588, 1.442695
        %v599 = vpow.pop %v598
        %v600 = vmul.f32 %v589, 1.442695
        %v601 = vpow.pop %v600
        %v602 = vmul.f32 %v590, 1.442695
        %v603 = vpow.pop %v602
        %v604 = vmul.f32 %v591, 1.442695
        %v605 = vpow.pop %v604
        %v606 = vmul.f32 %v592, 1.442695
        %v607 = vpow.pop %v606
        %v608 = vmul.f32 %v593, 1.442695
        %v609 = vpow.pop %v608
        %v610 = vmul.f32 %v570, %v595
        %v611 = vmul.f32 %v571, %v597
        %v612 = vmul.f32 %v572, %v599
        %v613 = vmul.f32 %v573, %v601
        %v614 = vmul.f32 %v574, %v603
        %v615 = vmul.f32 %v575, %v605
        %v616 = vmul.f32 %v576, %v607
        %v617 = vmul.f32 %v577, %v609
        %v618 = vsub.f32 1.0, %v610
        %v619 = vsub.f32 1.0, %v611
        %v620 = vsub.f32 1.0, %v612
        %v621 = vsub.f32 1.0, %v613
        %v622 = vsub.f32 1.0, %v614
        %v623 = vsub.f32 1.0, %v615
        %v624 = vsub.f32 1.0, %v616
        %v625 = vsub.f32 1.0, %v617
        %v626 = vrot.slane %v618, 4
        %v627 = vadd.f32 %v618, %v626
        %v628 = vrot.slane %v627, 2
        %v629 = vadd.f32 %v627, %v628
        %v630 = vrot.slane %v629, 1
        %v631 = vadd.f32 %v629, %v630
        %v632 = vrot.slane %v619, 4
        %v633 = vadd.f32 %v619, %v632
        %v634 = vrot.slane %v633, 2
        %v635 = vadd.f32 %v633, %v634
        %v636 = vrot.slane %v635, 1
        %v637 = vadd.f32 %v635, %v636
        %v638 = vrot.slane %v620, 4
        %v639 = vadd.f32 %v620, %v638
        %v640 = vrot.slane %v639, 2
        %v641 = vadd.f32 %v639, %v640
        %v642 = vrot.slane %v641, 1
        %v643 = vadd.f32 %v641, %v642
        %v644 = vrot.slane %v621, 4
        %v645 = vadd.f32 %v621, %v644
        %v646 = vrot.slane %v645, 2
        %v647 = vadd.f32 %v645, %v646
        %v648 = vrot.slane %v647, 1
        %v649 = vadd.f32 %v647, %v648
        %v650 = vrot.slane %v622, 4
        %v651 = vadd.f32 %v622, %v650
        %v652 = vrot.slane %v651, 2
        %v653 = vadd.f32 %v651, %v652
        %v654 = vrot.slane %v653, 1
        %v655 = vadd.f32 %v653, %v654
        %v656 = vrot.slane %v623, 4
        %v657 = vadd.f32 %v623, %v656
        %v658 = vrot.slane %v657, 2
        %v659 = vadd.f32 %v657, %v658
        %v660 = vrot.slane %v659, 1
        %v661 = vadd.f32 %v659, %v660
        %v662 = vrot.slane %v624, 4
        %v663 = vadd.f32 %v624, %v662
        %v664 = vrot.slane %v663, 2
        %v665 = vadd.f32 %v663, %v664
        %v666 = vrot.slane %v665, 1
        %v667 = vadd.f32 %v665, %v666
        %v668 = vrot.slane %v625, 4
        %v669 = vadd.f32 %v625, %v668
        %v670 = vrot.slane %v669, 2
        %v671 = vadd.f32 %v669, %v670
        %v672 = vrot.slane %v671, 1
        %v673 = vadd.f32 %v671, %v672
        %v674 = vadd.f32 %v631, 0.0
        %v675 = vadd.f32 %v637, 0.0
        %v676 = vadd.f32 %v643, 0.0
        %v677 = vadd.f32 %v649, 0.0
        %v678 = vadd.f32 %v655, 0.0
        %v679 = vadd.f32 %v661, 0.0
        %v680 = vadd.f32 %v667, 0.0
        %v681 = vadd.f32 %v673, 0.0
        %s682 = scalar_lea.vmem [#allocation9], 8
        %v683 = vld [vmem:[%s682] sm:$0xff]
        %v684 = vsub.f32 %v683, %v402
        %v685 = vsub.f32 %v683, %v403
        %v686 = vsub.f32 %v683, %v404
        %v687 = vsub.f32 %v683, %v405
        %v688 = vsub.f32 %v683, %v406
        %v689 = vsub.f32 %v683, %v407
        %v690 = vsub.f32 %v683, %v408
        %v691 = vsub.f32 %v683, %v409
        %v692 = vand.u32 2147483647, %v684
        %v693 = vand.u32 2147483647, %v685
        %v694 = vand.u32 2147483647, %v686
        %v695 = vand.u32 2147483647, %v687
        %v696 = vand.u32 2147483647, %v688
        %v697 = vand.u32 2147483647, %v689
        %v698 = vand.u32 2147483647, %v690
        %v699 = vand.u32 2147483647, %v691
        %v700 = vmul.f32 %v692, %v434
        %v701 = vmul.f32 %v693, %v435
        %v702 = vmul.f32 %v694, %v436
        %v703 = vmul.f32 %v695, %v437
        %v704 = vmul.f32 %v696, %v438
        %v705 = vmul.f32 %v697, %v439
        %v706 = vmul.f32 %v698, %v440
        %v707 = vmul.f32 %v699, %v441
        %v708 = vmul.f32 %v700, 0.3275911
        %v709 = vmul.f32 %v701, 0.3275911
        %v710 = vmul.f32 %v702, 0.3275911
        %v711 = vmul.f32 %v703, 0.3275911
        %v712 = vmul.f32 %v704, 0.3275911
        %v713 = vmul.f32 %v705, 0.3275911
        %v714 = vmul.f32 %v706, 0.3275911
        %v715 = vmul.f32 %v707, 0.3275911
        %v716 = vadd.f32 %v708, 1.0
        %v717 = vadd.f32 %v709, 1.0
        %v718 = vadd.f32 %v710, 1.0
        %v719 = vadd.f32 %v711, 1.0
        %v720 = vadd.f32 %v712, 1.0
        %v721 = vadd.f32 %v713, 1.0
        %v722 = vadd.f32 %v714, 1.0
        %v723 = vadd.f32 %v715, 1.0
        %v724 = vrcp.pop %v716
        %v725 = vrcp.pop %v717
        %v726 = vrcp.pop %v718
        %v727 = vrcp.pop %v719
        %v728 = vrcp.pop %v720
        %v729 = vrcp.pop %v721
        %v730 = vrcp.pop %v722
        %v731 = vrcp.pop %v723
        %v732 = vmul.f32 %v716, %v724
        %v733 = vmul.f32 %v717, %v725
        %v734 = vmul.f32 %v718, %v726
        %v735 = vmul.f32 %v719, %v727
        %v736 = vmul.f32 %v720, %v728
        %v737 = vmul.f32 %v721, %v729
        %v738 = vmul.f32 %v722, %v730
        %v739 = vmul.f32 %v723, %v731
        %v740 = vsub.f32 2.0, %v732
        %v741 = vsub.f32 2.0, %v733
        %v742 = vsub.f32 2.0, %v734
        %v743 = vsub.f32 2.0, %v735
        %v744 = vsub.f32 2.0, %v736
        %v745 = vsub.f32 2.0, %v737
        %v746 = vsub.f32 2.0, %v738
        %v747 = vsub.f32 2.0, %v739
        %v748 = vmul.f32 %v724, %v740
        %v749 = vmul.f32 %v725, %v741
        %v750 = vmul.f32 %v726, %v742
        %v751 = vmul.f32 %v727, %v743
        %v752 = vmul.f32 %v728, %v744
        %v753 = vmul.f32 %v729, %v745
        %v754 = vmul.f32 %v730, %v746
        %v755 = vmul.f32 %v731, %v747
        %v756 = vmul.f32 %v748, 1.0614054
        %v757 = vmul.f32 %v749, 1.0614054
        %v758 = vmul.f32 %v750, 1.0614054
        %v759 = vmul.f32 %v751, 1.0614054
        %v760 = vmul.f32 %v752, 1.0614054
        %v761 = vmul.f32 %v753, 1.0614054
        %v762 = vmul.f32 %v754, 1.0614054
        %v763 = vmul.f32 %v755, 1.0614054
        %v764 = vadd.f32 %v756, -1.4531521
        %v765 = vadd.f32 %v757, -1.4531521
        %v766 = vadd.f32 %v758, -1.4531521
        %v767 = vadd.f32 %v759, -1.4531521
        %v768 = vadd.f32 %v760, -1.4531521
        %v769 = vadd.f32 %v761, -1.4531521
        %v770 = vadd.f32 %v762, -1.4531521
        %v771 = vadd.f32 %v763, -1.4531521
        %v772 = vmul.f32 %v764, %v748
        %v773 = vmul.f32 %v765, %v749
        %v774 = vmul.f32 %v766, %v750
        %v775 = vmul.f32 %v767, %v751
        %v776 = vmul.f32 %v768, %v752
        %v777 = vmul.f32 %v769, %v753
        %v778 = vmul.f32 %v770, %v754
        %v779 = vmul.f32 %v771, %v755
        %v780 = vadd.f32 %v772, 1.4214138
        %v781 = vadd.f32 %v773, 1.4214138
        %v782 = vadd.f32 %v774, 1.4214138
        %v783 = vadd.f32 %v775, 1.4214138
        %v784 = vadd.f32 %v776, 1.4214138
        %v785 = vadd.f32 %v777, 1.4214138
        %v786 = vadd.f32 %v778, 1.4214138
        %v787 = vadd.f32 %v779, 1.4214138
        %v788 = vmul.f32 %v780, %v748
        %v789 = vmul.f32 %v781, %v749
        %v790 = vmul.f32 %v782, %v750
        %v791 = vmul.f32 %v783, %v751
        %v792 = vmul.f32 %v784, %v752
        %v793 = vmul.f32 %v785, %v753
        %v794 = vmul.f32 %v786, %v754
        %v795 = vmul.f32 %v787, %v755
        %v796 = vadd.f32 %v788, -0.28449672
        %v797 = vadd.f32 %v789, -0.28449672
        %v798 = vadd.f32 %v790, -0.28449672
        %v799 = vadd.f32 %v791, -0.28449672
        %v800 = vadd.f32 %v792, -0.28449672
        %v801 = vadd.f32 %v793, -0.28449672
        %v802 = vadd.f32 %v794, -0.28449672
        %v803 = vadd.f32 %v795, -0.28449672
        %v804 = vmul.f32 %v796, %v748
        %v805 = vmul.f32 %v797, %v749
        %v806 = vmul.f32 %v798, %v750
        %v807 = vmul.f32 %v799, %v751
        %v808 = vmul.f32 %v800, %v752
        %v809 = vmul.f32 %v801, %v753
        %v810 = vmul.f32 %v802, %v754
        %v811 = vmul.f32 %v803, %v755
        %v812 = vadd.f32 %v804, 0.2548296
        %v813 = vadd.f32 %v805, 0.2548296
        %v814 = vadd.f32 %v806, 0.2548296
        %v815 = vadd.f32 %v807, 0.2548296
        %v816 = vadd.f32 %v808, 0.2548296
        %v817 = vadd.f32 %v809, 0.2548296
        %v818 = vadd.f32 %v810, 0.2548296
        %v819 = vadd.f32 %v811, 0.2548296
        %v820 = vmul.f32 %v812, %v748
        %v821 = vmul.f32 %v813, %v749
        %v822 = vmul.f32 %v814, %v750
        %v823 = vmul.f32 %v815, %v751
        %v824 = vmul.f32 %v816, %v752
        %v825 = vmul.f32 %v817, %v753
        %v826 = vmul.f32 %v818, %v754
        %v827 = vmul.f32 %v819, %v755
        %v828 = vsub.f32 0.0, %v700
        %v829 = vsub.f32 0.0, %v701
        %v830 = vsub.f32 0.0, %v702
        %v831 = vsub.f32 0.0, %v703
        %v832 = vsub.f32 0.0, %v704
        %v833 = vsub.f32 0.0, %v705
        %v834 = vsub.f32 0.0, %v706
        %v835 = vsub.f32 0.0, %v707
        %v836 = vmul.f32 %v828, %v700
        %v837 = vmul.f32 %v829, %v701
        %v838 = vmul.f32 %v830, %v702
        %v839 = vmul.f32 %v831, %v703
        %v840 = vmul.f32 %v832, %v704
        %v841 = vmul.f32 %v833, %v705
        %v842 = vmul.f32 %v834, %v706
        %v843 = vmul.f32 %v835, %v707
        %v844 = vmul.f32 %v836, 1.442695
        %v845 = vpow.pop %v844
        %v846 = vmul.f32 %v837, 1.442695
        %v847 = vpow.pop %v846
        %v848 = vmul.f32 %v838, 1.442695
        %v849 = vpow.pop %v848
        %v850 = vmul.f32 %v839, 1.442695
        %v851 = vpow.pop %v850
        %v852 = vmul.f32 %v840, 1.442695
        %v853 = vpow.pop %v852
        %v854 = vmul.f32 %v841, 1.442695
        %v855 = vpow.pop %v854
        %v856 = vmul.f32 %v842, 1.442695
        %v857 = vpow.pop %v856
        %v858 = vmul.f32 %v843, 1.442695
        %v859 = vpow.pop %v858
        %v860 = vmul.f32 %v820, %v845
        %v861 = vmul.f32 %v821, %v847
        %v862 = vmul.f32 %v822, %v849
        %v863 = vmul.f32 %v823, %v851
        %v864 = vmul.f32 %v824, %v853
        %v865 = vmul.f32 %v825, %v855
        %v866 = vmul.f32 %v826, %v857
        %v867 = vmul.f32 %v827, %v859
        %v868 = vsub.f32 1.0, %v860
        %v869 = vsub.f32 1.0, %v861
        %v870 = vsub.f32 1.0, %v862
        %v871 = vsub.f32 1.0, %v863
        %v872 = vsub.f32 1.0, %v864
        %v873 = vsub.f32 1.0, %v865
        %v874 = vsub.f32 1.0, %v866
        %v875 = vsub.f32 1.0, %v867
        %v876 = vrot.slane %v868, 4
        %v877 = vadd.f32 %v868, %v876
        %v878 = vrot.slane %v877, 2
        %v879 = vadd.f32 %v877, %v878
        %v880 = vrot.slane %v879, 1
        %v881 = vadd.f32 %v879, %v880
        %v882 = vrot.slane %v869, 4
        %v883 = vadd.f32 %v869, %v882
        %v884 = vrot.slane %v883, 2
        %v885 = vadd.f32 %v883, %v884
        %v886 = vrot.slane %v885, 1
        %v887 = vadd.f32 %v885, %v886
        %v888 = vrot.slane %v870, 4
        %v889 = vadd.f32 %v870, %v888
        %v890 = vrot.slane %v889, 2
        %v891 = vadd.f32 %v889, %v890
        %v892 = vrot.slane %v891, 1
        %v893 = vadd.f32 %v891, %v892
        %v894 = vrot.slane %v871, 4
        %v895 = vadd.f32 %v871, %v894
        %v896 = vrot.slane %v895, 2
        %v897 = vadd.f32 %v895, %v896
        %v898 = vrot.slane %v897, 1
        %v899 = vadd.f32 %v897, %v898
        %v900 = vrot.slane %v872, 4
        %v901 = vadd.f32 %v872, %v900
        %v902 = vrot.slane %v901, 2
        %v903 = vadd.f32 %v901, %v902
        %v904 = vrot.slane %v903, 1
        %v905 = vadd.f32 %v903, %v904
        %v906 = vrot.slane %v873, 4
        %v907 = vadd.f32 %v873, %v906
        %v908 = vrot.slane %v907, 2
        %v909 = vadd.f32 %v907, %v908
        %v910 = vrot.slane %v909, 1
        %v911 = vadd.f32 %v909, %v910
        %v912 = vrot.slane %v874, 4
        %v913 = vadd.f32 %v874, %v912
        %v914 = vrot.slane %v913, 2
        %v915 = vadd.f32 %v913, %v914
        %v916 = vrot.slane %v915, 1
        %v917 = vadd.f32 %v915, %v916
        %v918 = vrot.slane %v875, 4
        %v919 = vadd.f32 %v875, %v918
        %v920 = vrot.slane %v919, 2
        %v921 = vadd.f32 %v919, %v920
        %v922 = vrot.slane %v921, 1
        %v923 = vadd.f32 %v921, %v922
        %v924 = vadd.f32 %v674, %v881
        %v925 = vadd.f32 %v675, %v887
        %v926 = vadd.f32 %v676, %v893
        %v927 = vadd.f32 %v677, %v899
        %v928 = vadd.f32 %v678, %v905
        %v929 = vadd.f32 %v679, %v911
        %v930 = vadd.f32 %v680, %v917
        %v931 = vadd.f32 %v681, %v923
        %vm940 = vcmask 1041409
        %v941 = vsel %vm940, %v925, %v924
        %vm942 = vcmask 1042434
        %v943 = vsel %vm942, %v926, %v941
        %vm944 = vcmask 1043459
        %v945 = vsel %vm944, %v927, %v943
        %vm946 = vcmask 1044484
        %v947 = vsel %vm946, %v928, %v945
        %vm948 = vcmask 1045509
        %v949 = vsel %vm948, %v929, %v947
        %vm950 = vcmask 1046534
        %v951 = vsel %vm950, %v930, %v949
        %vm952 = vcmask 1047559
        %v953 = vsel %vm952, %v931, %v951
        %v955 = vsub.f32 %v384, %v953
        %956 = vst [vmem:[%s251] sm:$0xff] %v955
        %s957 = sand.u32 %s113, 1
        %s958 = scalar_lea.sflag [#allocation6], %s957
        %s959 = sand.u32 %s113, 1
        %s960 = smul.addr %s959, 8
        %s961 = scalar_lea.vmem [#allocation10], %s960
        // Predicated region
        $region45: #{tpu_custom_call.1} parent=31 // pred_check
          %p962 = pneg %p123
        $region46: #{tpu_custom_call.1} parent=31 // pred_check_branch
          %964 = sbr.rel (%p962) target = $region48
        $region47: #{tpu_custom_call.1} parent=31 // pred_region
          %966 = vsyncadd %s958, 0
          %s967 = smul.addr %s32, 8
          %s968 = scalar_lea.hbm %s4, %s967
          %s970 = sshll.u32 %s961, 4
          %s971 = int_to_ptr.vmem [resolvable:$true] %s970
          %s972 = sshll.u32 %s968, 4
          %s973 = int_to_ptr.hbm [resolvable:$true] %s972
          %975 = dma.vmem_to_hbm [thread:$0]  %s971, 128, %s973, %s958
        $region48: #{tpu_custom_call.1} parent=31 // pred_fallthru
          _
      $region32: #{tpu_custom_call.1} parent=5 // pred_fallthru
        _
      %p976 = scmp.le.s32.totalorder 2, %s27
      // Predicated region
      $region49: #{tpu_custom_call.1} parent=5 // pred_check
        %p977 = pneg %p976
      $region50: #{tpu_custom_call.1} parent=5 // pred_check_branch
        %979 = sbr.rel (%p977) target = $region52
      $region51: #{tpu_custom_call.1} parent=5 // pred_region
        %s980 = ssub.s32 %s27, 2
        // Predicated region
        $region53: #{tpu_custom_call.1} parent=51 // pred_check
          %p981 = pneg %p129
        $region54: #{tpu_custom_call.1} parent=51 // pred_check_branch
          %983 = sbr.rel (%p981) target = $region56
        $region55: #{tpu_custom_call.1} parent=51 // pred_region
          %s984 = sand.u32 %s114, 1
          %s985 = scalar_lea.sflag [#allocation6], %s984
          %s986 = sand.u32 %s114, 1
          %s987 = smul.addr %s986, 8
          %s988 = scalar_lea.vmem [#allocation10], %s987
          %990 = dma.done %s985, 128
        $region56: #{tpu_custom_call.1} parent=51 // pred_fallthru
          _
      $region52: #{tpu_custom_call.1} parent=5 // pred_fallthru
        _
    $region6: #{tpu_custom_call.1} parent=1 // loop_footer
      %s31 = sadd.s32 1, %s27
    $region7: #{tpu_custom_call.1} parent=1 // loop_footer_branch
      %26 = sbr.rel target = $region3
    $region8: #{tpu_custom_call.1} parent=1 // loop_exit
      _
    %991 = vsyncpa [#allocation5], 1
    %s992 = scalar_lea.sflag [#allocation5], 1
    %993 = vsyncpa %s992, 1
    %994 = vsyncpa [#allocation8], 1
    %s995 = scalar_lea.sflag [#allocation8], 1
    %996 = vsyncpa %s995, 1
    %997 = vsyncpa [#allocation6], 1
    %s998 = scalar_lea.sflag [#allocation6], 1
    %999 = vsyncpa %s998, 1

</llo_original>
